<compile_context>
chip_gen: v5e
topology: v5e:2x2
jax: 0.10.0
libtpu: 0.0.40
codegen_flags: <defaults>
</compile_context>

<pallas_src>
import functools
import math

import jax
import jax.numpy as jnp
from jax.experimental import pallas as pl
from jax.experimental.pallas import tpu as pltpu

# Make the pure-JAX reference and the in-kernel MXU matmuls use the same
# (high) precision so the numerical check is meaningful.
jax.config.update("jax_default_matmul_precision", "highest")


# ---------------------------------------------------------------------------
# Fused multi-head-attention kernel
# ---------------------------------------------------------------------------
def _mha_kernel(x_ref, wq_ref, wk_ref, wv_ref, bq_ref, bk_ref, bv_ref,
                wo_ref, bo_ref, o_ref, acc_ref, *, head_dim):
    """One (batch, head) grid step.

    x_ref : (1, S, D)      input block for this batch element
    wq/wk/wv : (1, D, hd)  per-head projection weights
    bq/bk/bv : (1, 1, hd)  per-head projection biases
    wo_ref : (1, hd, E)    per-head slice of the output projection
    bo_ref : (1, E)        output-projection bias (added once)
    o_ref  : (1, S, E)     output block (same block across the head axis)
    acc_ref: (S, E) f32    VMEM accumulator, persists across head iterations
    """
    h_id = pl.program_id(1)

    @pl.when(h_id == 0)
    def _init():
        # Start the accumulator with the o_proj bias (added exactly once).
        acc_ref[...] = jnp.broadcast_to(bo_ref[...].astype(jnp.float32),
                                        acc_ref.shape)

    x = x_ref[0].astype(jnp.float32)                               # (S, D)

    q = jnp.dot(x, wq_ref[0], preferred_element_type=jnp.float32) + bq_ref[0]
    k = jnp.dot(x, wk_ref[0], preferred_element_type=jnp.float32) + bk_ref[0]
    v = jnp.dot(x, wv_ref[0], preferred_element_type=jnp.float32) + bv_ref[0]

    # scaled dot-product attention for this head: (S, S)
    scale = 1.0 / math.sqrt(head_dim)
    logits = jax.lax.dot_general(q, k, (((1,), (1,)), ((), ())),
                                 preferred_element_type=jnp.float32) * scale
    m = jnp.max(logits, axis=-1, keepdims=True)
    p = jnp.exp(logits - m)
    attn = p / jnp.sum(p, axis=-1, keepdims=True)
    vals = jnp.dot(attn, v, preferred_element_type=jnp.float32)    # (S, hd)

    # Fold the output projection: accumulate this head's contribution.
    acc_ref[...] += jnp.dot(vals, wo_ref[0],
                            preferred_element_type=jnp.float32)

    @pl.when(h_id == pl.num_programs(1) - 1)
    def _finalize():
        o_ref[0] = acc_ref[...].astype(o_ref.dtype)


def mha_forward(x, wq, wk, wv, bq, bk, bv, wo, bo, *, head_dim):
    """x: (B, S, D) -> (B, S, E) fused multi-head attention."""
    B, S, D = x.shape
    num_heads = wq.shape[0]
    E = wo.shape[-1]

    kern = functools.partial(_mha_kernel, head_dim=head_dim)
    return pl.pallas_call(
        kern,
        out_shape=jax.ShapeDtypeStruct((B, S, E), x.dtype),
        grid_spec=pltpu.PrefetchScalarGridSpec(
            num_scalar_prefetch=0,
            grid=(B, num_heads),
            in_specs=[
                pl.BlockSpec((1, S, D), lambda b, h: (b, 0, 0)),          # x
                pl.BlockSpec((1, D, head_dim), lambda b, h: (h, 0, 0)),   # wq
                pl.BlockSpec((1, D, head_dim), lambda b, h: (h, 0, 0)),   # wk
                pl.BlockSpec((1, D, head_dim), lambda b, h: (h, 0, 0)),   # wv
                pl.BlockSpec((1, 1, head_dim), lambda b, h: (h, 0, 0)),   # bq
                pl.BlockSpec((1, 1, head_dim), lambda b, h: (h, 0, 0)),   # bk
                pl.BlockSpec((1, 1, head_dim), lambda b, h: (h, 0, 0)),   # bv
                pl.BlockSpec((1, head_dim, E), lambda b, h: (h, 0, 0)),   # wo
                pl.BlockSpec((1, E), lambda b, h: (0, 0)),                # bo
            ],
            out_specs=pl.BlockSpec((1, S, E), lambda b, h: (b, 0, 0)),
            scratch_shapes=[pltpu.VMEM((S, E), jnp.float32)],
        ),
        compiler_params=pltpu.CompilerParams(
            dimension_semantics=("parallel", "arbitrary")),
    )(x, wq, wk, wv, bq, bk, bv, wo, bo)


# ---------------------------------------------------------------------------
# Module wrapper (deterministic synthetic parameters, PyTorch-equivalent math)
# ---------------------------------------------------------------------------
class PallasMultiHeadAttention:
    def __init__(self, input_dim, embed_dim, num_heads, key):
        assert embed_dim % num_heads == 0, \
            "Embedding dimension must be 0 modulo number of heads."
        self.embed_dim = embed_dim
        self.num_heads = num_heads
        self.head_dim = embed_dim // num_heads

        k1, k2, k3, k4 = jax.random.split(key, 4)

        # nn.Linear(input_dim, 3*embed_dim) — weights stored transposed
        # (input_dim, 3*embed_dim) so kernels compute x @ W.  Xavier-uniform.
        lim_qkv = math.sqrt(6.0 / (input_dim + 3 * embed_dim))
        self.w_qkv = jax.random.uniform(k1, (input_dim, 3 * embed_dim),
                                        jnp.float32, -lim_qkv, lim_qkv)
        self.b_qkv = 0.02 * jax.random.normal(k2, (3 * embed_dim,), jnp.float32)

        # nn.Linear(embed_dim, embed_dim) — stored transposed for values @ W.
        lim_o = math.sqrt(6.0 / (embed_dim + embed_dim))
        self.w_o = jax.random.uniform(k3, (embed_dim, embed_dim),
                                      jnp.float32, -lim_o, lim_o)
        self.b_o = 0.02 * jax.random.normal(k4, (embed_dim,), jnp.float32)

        # --- kernel-friendly re-layout (host-side, once) ------------------
        H, hd, D, E = num_heads, self.head_dim, input_dim, embed_dim
        # qkv columns are ordered [head, gate(q,k,v), dim] (matches the
        # PyTorch reshape (B,S,H,3*hd) followed by chunk(3, dim=-1)).
        w = self.w_qkv.reshape(D, H, 3, hd)
        self.wq = jnp.transpose(w[:, :, 0, :], (1, 0, 2))   # (H, D, hd)
        self.wk = jnp.transpose(w[:, :, 1, :], (1, 0, 2))
        self.wv = jnp.transpose(w[:, :, 2, :], (1, 0, 2))
        b = self.b_qkv.reshape(H, 3, hd)
        self.bq = b[:, 0, :].reshape(H, 1, hd)
        self.bk = b[:, 1, :].reshape(H, 1, hd)
        self.bv = b[:, 2, :].reshape(H, 1, hd)
        # o_proj rows split by head: o = sum_h values_h @ w_o[h*hd:(h+1)*hd]
        self.wo_heads = self.w_o.reshape(H, hd, E)           # (H, hd, E)
        self.bo = self.b_o.reshape(1, E)

    def __call__(self, x, mask=None, return_attention=False):
        # TODO(synk): mask / return_attention paths (non-default in the spec)
        # are not implemented in the fused kernel.
        assert mask is None and not return_attention
        return mha_forward(x, self.wq, self.wk, self.wv,
                           self.bq, self.bk, self.bv,
                           self.wo_heads, self.bo, head_dim=self.head_dim)


# ---------------------------------------------------------------------------
# Pure-JAX reference (mirrors the PyTorch forward exactly) and main
# ---------------------------------------------------------------------------
def _reference_forward(mha, x):
    B, S, D = x.shape
    H, hd, E = mha.num_heads, mha.head_dim, mha.embed_dim
    qkv = jnp.einsum("bsd,de->bse", x, mha.w_qkv) + mha.b_qkv   # (B,S,3E)
    qkv = qkv.reshape(B, S, H, 3 * hd).transpose(0, 2, 1, 3)    # (B,H,S,3hd)
    q, k, v = jnp.split(qkv, 3, axis=-1)
    logits = jnp.einsum("bhqd,bhkd->bhqk", q, k) / math.sqrt(hd)
    attn = jax.nn.softmax(logits, axis=-1)
    vals = jnp.einsum("bhqk,bhkd->bhqd", attn, v)
    vals = vals.transpose(0, 2, 1, 3).reshape(B, S, E)
    return jnp.einsum("bse,ef->bsf", vals, mha.w_o) + mha.b_o


if __name__ == "__main__":
    BATCH = 2
    SEQ = 16
    INPUT_DIM = 128     # == embed_dim (lane-dense, 128-multiple)
    EMBED_DIM = 128
    NUM_HEADS = 4

    key = jax.random.PRNGKey(0)
    k_params, k_x = jax.random.split(key, 2)

    mha = PallasMultiHeadAttention(INPUT_DIM, EMBED_DIM, NUM_HEADS, k_params)
    x = jax.random.normal(k_x, (BATCH, SEQ, INPUT_DIM), jnp.float32)

    out = mha(x)
    out = jax.block_until_ready(out)

    ref = _reference_forward(mha, x)
    assert out.shape == (BATCH, SEQ, EMBED_DIM)
    assert jnp.allclose(out, ref, atol=1e-4, rtol=1e-4), (
        float(jnp.max(jnp.abs(out - ref))))

    print("KERNEL_OK")
</pallas_src>

<mosaic_0001>
module attributes {stable_mosaic.version = 11 : i64} {
  func.func @_mha_kernel(%arg0: i32, %arg1: i32, %arg2: memref<1x16x128xf32, #tpu.memory_space<vmem>>, %arg3: memref<1x128x32xf32, #tpu.memory_space<vmem>>, %arg4: memref<1x128x32xf32, #tpu.memory_space<vmem>>, %arg5: memref<1x128x32xf32, #tpu.memory_space<vmem>>, %arg6: memref<1x1x32xf32, #tpu.memory_space<vmem>>, %arg7: memref<1x1x32xf32, #tpu.memory_space<vmem>>, %arg8: memref<1x1x32xf32, #tpu.memory_space<vmem>>, %arg9: memref<1x32x128xf32, #tpu.memory_space<vmem>>, %arg10: memref<1x128xf32, #tpu.memory_space<vmem>>, %arg11: memref<1x16x128xf32, #tpu.memory_space<vmem>>, %arg12: memref<16x128xf32, #tpu.memory_space<vmem>>) attributes {dimension_semantics = [#tpu.dimension_semantics<parallel>, #tpu.dimension_semantics<arbitrary>], iteration_bounds = array<i64: 2, 4>, scalar_prefetch = 0 : i64, scratch_operands = 1 : i64, tpu.core_type = #tpu.core_type<tc>, window_params = [{transform_indices = @transform_0, window_bounds = array<i64: 1, 16, 128>}, {transform_indices = @transform_1, window_bounds = array<i64: 1, 128, 32>}, {transform_indices = @transform_2, window_bounds = array<i64: 1, 128, 32>}, {transform_indices = @transform_3, window_bounds = array<i64: 1, 128, 32>}, {transform_indices = @transform_4, window_bounds = array<i64: 1, 1, 32>}, {transform_indices = @transform_5, window_bounds = array<i64: 1, 1, 32>}, {transform_indices = @transform_6, window_bounds = array<i64: 1, 1, 32>}, {transform_indices = @transform_7, window_bounds = array<i64: 1, 32, 128>}, {pipeline_mode = #tpu.pipeline_mode<synchronous>, transform_indices = @transform_8, window_bounds = array<i64: 1, 128>}, {transform_indices = @transform_9, window_bounds = array<i64: 1, 16, 128>}]} {
    %c0_i32 = arith.constant 0 : i32
    %0 = arith.cmpi eq, %arg1, %c0_i32 : i32
    %1 = arith.extui %0 : i1 to i32
    %c0_i32_0 = arith.constant 0 : i32
    %2 = arith.cmpi ne, %1, %c0_i32_0 : i32
    scf.if %2 {
      %c0_37 = arith.constant 0 : index
      %c0_38 = arith.constant 0 : index
      %48 = vector.load %arg10[%c0_37, %c0_38] : memref<1x128xf32, #tpu.memory_space<vmem>>, vector<1x128xf32>
      %49 = vector.shape_cast %48 : vector<1x128xf32> to vector<1x128xf32>
      %50 = vector.broadcast %49 : vector<1x128xf32> to vector<16x128xf32>
      %c0_39 = arith.constant 0 : index
      %c0_40 = arith.constant 0 : index
      %51 = vector.load %arg12[%c0_39, %c0_40] : memref<16x128xf32, #tpu.memory_space<vmem>>, vector<16x128xf32>
      tpu.vector_store %arg12[%c0_39, %c0_40], %50 {strides = array<i32>} : memref<16x128xf32, #tpu.memory_space<vmem>>, vector<16x128xf32>,
    } else {
    }
    %c0 = arith.constant 0 : index
    %c0_1 = arith.constant 0 : index
    %c0_2 = arith.constant 0 : index
    %3 = vector.load %arg2[%c0, %c0_1, %c0_2] : memref<1x16x128xf32, #tpu.memory_space<vmem>>, vector<1x16x128xf32>
    %4 = vector.shape_cast %3 : vector<1x16x128xf32> to vector<16x128xf32>
    %c0_3 = arith.constant 0 : index
    %c0_4 = arith.constant 0 : index
    %c0_5 = arith.constant 0 : index
    %5 = vector.load %arg3[%c0_3, %c0_4, %c0_5] : memref<1x128x32xf32, #tpu.memory_space<vmem>>, vector<1x128x32xf32>
    %6 = vector.shape_cast %5 : vector<1x128x32xf32> to vector<128x32xf32>
    %cst = arith.constant dense<0.000000e+00> : vector<16x32xf32>
    %7 = tpu.matmul %4, %6, %cst {dimension_numbers = #tpu.dot_dimension_numbers<[1], [0], [0], [1], [0, 0, 1, 1], [], []>, precision = #tpu.contract_precision<fp32>} : vector<16x128xf32>, vector<128x32xf32>, vector<16x32xf32> -> vector<16x32xf32>
    %c0_6 = arith.constant 0 : index
    %c0_7 = arith.constant 0 : index
    %c0_8 = arith.constant 0 : index
    %8 = vector.load %arg6[%c0_6, %c0_7, %c0_8] : memref<1x1x32xf32, #tpu.memory_space<vmem>>, vector<1x1x32xf32>
    %9 = vector.shape_cast %8 : vector<1x1x32xf32> to vector<1x32xf32>
    %10 = vector.broadcast %9 : vector<1x32xf32> to vector<16x32xf32>
    %11 = arith.addf %7, %10 : vector<16x32xf32>
    %c0_9 = arith.constant 0 : index
    %c0_10 = arith.constant 0 : index
    %c0_11 = arith.constant 0 : index
    %12 = vector.load %arg4[%c0_9, %c0_10, %c0_11] : memref<1x128x32xf32, #tpu.memory_space<vmem>>, vector<1x128x32xf32>
    %13 = vector.shape_cast %12 : vector<1x128x32xf32> to vector<128x32xf32>
    %cst_12 = arith.constant dense<0.000000e+00> : vector<16x32xf32>
    %14 = tpu.matmul %4, %13, %cst_12 {dimension_numbers = #tpu.dot_dimension_numbers<[1], [0], [0], [1], [0, 0, 1, 1], [], []>, precision = #tpu.contract_precision<fp32>} : vector<16x128xf32>, vector<128x32xf32>, vector<16x32xf32> -> vector<16x32xf32>
    %c0_13 = arith.constant 0 : index
    %c0_14 = arith.constant 0 : index
    %c0_15 = arith.constant 0 : index
    %15 = vector.load %arg7[%c0_13, %c0_14, %c0_15] : memref<1x1x32xf32, #tpu.memory_space<vmem>>, vector<1x1x32xf32>
    %16 = vector.shape_cast %15 : vector<1x1x32xf32> to vector<1x32xf32>
    %17 = vector.broadcast %16 : vector<1x32xf32> to vector<16x32xf32>
    %18 = arith.addf %14, %17 : vector<16x32xf32>
    %c0_16 = arith.constant 0 : index
    %c0_17 = arith.constant 0 : index
    %c0_18 = arith.constant 0 : index
    %19 = vector.load %arg5[%c0_16, %c0_17, %c0_18] : memref<1x128x32xf32, #tpu.memory_space<vmem>>, vector<1x128x32xf32>
    %20 = vector.shape_cast %19 : vector<1x128x32xf32> to vector<128x32xf32>
    %cst_19 = arith.constant dense<0.000000e+00> : vector<16x32xf32>
    %21 = tpu.matmul %4, %20, %cst_19 {dimension_numbers = #tpu.dot_dimension_numbers<[1], [0], [0], [1], [0, 0, 1, 1], [], []>, precision = #tpu.contract_precision<fp32>} : vector<16x128xf32>, vector<128x32xf32>, vector<16x32xf32> -> vector<16x32xf32>
    %c0_20 = arith.constant 0 : index
    %c0_21 = arith.constant 0 : index
    %c0_22 = arith.constant 0 : index
    %22 = vector.load %arg8[%c0_20, %c0_21, %c0_22] : memref<1x1x32xf32, #tpu.memory_space<vmem>>, vector<1x1x32xf32>
    %23 = vector.shape_cast %22 : vector<1x1x32xf32> to vector<1x32xf32>
    %24 = vector.broadcast %23 : vector<1x32xf32> to vector<16x32xf32>
    %25 = arith.addf %21, %24 : vector<16x32xf32>
    %cst_23 = arith.constant dense<0.000000e+00> : vector<16x16xf32>
    %26 = tpu.matmul %11, %18, %cst_23 {dimension_numbers = #tpu.dot_dimension_numbers<[1], [1], [0], [0], [0, 0, 1, 0], [], []>, precision = #tpu.contract_precision<fp32>} : vector<16x32xf32>, vector<16x32xf32>, vector<16x16xf32> -> vector<16x16xf32>
    %cst_24 = arith.constant 0.176776692 : f32
    %27 = vector.broadcast %cst_24 : f32 to vector<16x16xf32>
    %28 = arith.mulf %26, %27 : vector<16x16xf32>
    %cst_25 = arith.constant dense<0xFF800000> : vector<16xf32>
    %29 = vector.multi_reduction <maximumf>, %28, %cst_25 [1] : vector<16x16xf32> to vector<16xf32>
    %30 = vector.shape_cast %29 : vector<16xf32> to vector<16x1xf32>
    %31 = vector.broadcast %30 : vector<16x1xf32> to vector<16x16xf32>
    %32 = arith.subf %28, %31 : vector<16x16xf32>
    %33 = math.exp %32 : vector<16x16xf32>
    %cst_26 = arith.constant dense<0.000000e+00> : vector<16xf32>
    %34 = vector.multi_reduction <add>, %33, %cst_26 [1] : vector<16x16xf32> to vector<16xf32>
    %35 = vector.shape_cast %34 : vector<16xf32> to vector<16x1xf32>
    %36 = vector.broadcast %35 : vector<16x1xf32> to vector<16x16xf32>
    %37 = arith.divf %33, %36 : vector<16x16xf32>
    %cst_27 = arith.constant dense<0.000000e+00> : vector<16x32xf32>
    %38 = tpu.matmul %37, %25, %cst_27 {dimension_numbers = #tpu.dot_dimension_numbers<[1], [0], [0], [1], [0, 0, 1, 1], [], []>, precision = #tpu.contract_precision<fp32>} : vector<16x16xf32>, vector<16x32xf32>, vector<16x32xf32> -> vector<16x32xf32>
    %c0_28 = arith.constant 0 : index
    %c0_29 = arith.constant 0 : index
    %39 = vector.load %arg12[%c0_28, %c0_29] : memref<16x128xf32, #tpu.memory_space<vmem>>, vector<16x128xf32>
    %c0_30 = arith.constant 0 : index
    %c0_31 = arith.constant 0 : index
    %c0_32 = arith.constant 0 : index
    %40 = vector.load %arg9[%c0_30, %c0_31, %c0_32] : memref<1x32x128xf32, #tpu.memory_space<vmem>>, vector<1x32x128xf32>
    %41 = vector.shape_cast %40 : vector<1x32x128xf32> to vector<32x128xf32>
    %cst_33 = arith.constant dense<0.000000e+00> : vector<16x128xf32>
    %42 = tpu.matmul %38, %41, %cst_33 {dimension_numbers = #tpu.dot_dimension_numbers<[1], [0], [0], [1], [0, 0, 1, 1], [], []>, precision = #tpu.contract_precision<fp32>} : vector<16x32xf32>, vector<32x128xf32>, vector<16x128xf32> -> vector<16x128xf32>
    %43 = arith.addf %39, %42 : vector<16x128xf32>
    %c0_34 = arith.constant 0 : index
    %c0_35 = arith.constant 0 : index
    %44 = vector.load %arg12[%c0_34, %c0_35] : memref<16x128xf32, #tpu.memory_space<vmem>>, vector<16x128xf32>
    tpu.vector_store %arg12[%c0_34, %c0_35], %43 {strides = array<i32>} : memref<16x128xf32, #tpu.memory_space<vmem>>, vector<16x128xf32>,
    %c3_i32 = arith.constant 3 : i32
    %45 = arith.cmpi eq, %arg1, %c3_i32 : i32
    %46 = arith.extui %45 : i1 to i32
    %c0_i32_36 = arith.constant 0 : i32
    %47 = arith.cmpi ne, %46, %c0_i32_36 : i32
    scf.if %47 {
      %c0_37 = arith.constant 0 : index
      %c0_38 = arith.constant 0 : index
      %48 = vector.load %arg12[%c0_37, %c0_38] : memref<16x128xf32, #tpu.memory_space<vmem>>, vector<16x128xf32>
      %c0_39 = arith.constant 0 : index
      %c0_40 = arith.constant 0 : index
      %c0_41 = arith.constant 0 : index
      %49 = vector.load %arg11[%c0_39, %c0_40, %c0_41] : memref<1x16x128xf32, #tpu.memory_space<vmem>>, vector<1x16x128xf32>
      %50 = vector.shape_cast %49 : vector<1x16x128xf32> to vector<16x128xf32>
      %51 = vector.shape_cast %48 : vector<16x128xf32> to vector<1x16x128xf32>
      tpu.vector_store %arg11[%c0_39, %c0_40, %c0_41], %51 {strides = array<i32>} : memref<1x16x128xf32, #tpu.memory_space<vmem>>, vector<1x16x128xf32>,
    } else {
    }
    return
  }
  func.func @transform_0(%arg0: i32, %arg1: i32) -> (i32, i32, i32) {
    %c0_i32 = arith.constant 0 : i32
    %c0_i32_0 = arith.constant 0 : i32
    %c0_i32_1 = arith.constant 0 : i32
    return %arg0, %c0_i32, %c0_i32_0 : i32, i32, i32
  }
  func.func @transform_1(%arg0: i32, %arg1: i32) -> (i32, i32, i32) {
    %c0_i32 = arith.constant 0 : i32
    %c0_i32_0 = arith.constant 0 : i32
    %c0_i32_1 = arith.constant 0 : i32
    return %arg1, %c0_i32, %c0_i32_0 : i32, i32, i32
  }
  func.func @transform_2(%arg0: i32, %arg1: i32) -> (i32, i32, i32) {
    %c0_i32 = arith.constant 0 : i32
    %c0_i32_0 = arith.constant 0 : i32
    %c0_i32_1 = arith.constant 0 : i32
    return %arg1, %c0_i32, %c0_i32_0 : i32, i32, i32
  }
  func.func @transform_3(%arg0: i32, %arg1: i32) -> (i32, i32, i32) {
    %c0_i32 = arith.constant 0 : i32
    %c0_i32_0 = arith.constant 0 : i32
    %c0_i32_1 = arith.constant 0 : i32
    return %arg1, %c0_i32, %c0_i32_0 : i32, i32, i32
  }
  func.func @transform_4(%arg0: i32, %arg1: i32) -> (i32, i32, i32) {
    %c0_i32 = arith.constant 0 : i32
    %c0_i32_0 = arith.constant 0 : i32
    %c0_i32_1 = arith.constant 0 : i32
    return %arg1, %c0_i32, %c0_i32_0 : i32, i32, i32
  }
  func.func @transform_5(%arg0: i32, %arg1: i32) -> (i32, i32, i32) {
    %c0_i32 = arith.constant 0 : i32
    %c0_i32_0 = arith.constant 0 : i32
    %c0_i32_1 = arith.constant 0 : i32
    return %arg1, %c0_i32, %c0_i32_0 : i32, i32, i32
  }
  func.func @transform_6(%arg0: i32, %arg1: i32) -> (i32, i32, i32) {
    %c0_i32 = arith.constant 0 : i32
    %c0_i32_0 = arith.constant 0 : i32
    %c0_i32_1 = arith.constant 0 : i32
    return %arg1, %c0_i32, %c0_i32_0 : i32, i32, i32
  }
  func.func @transform_7(%arg0: i32, %arg1: i32) -> (i32, i32, i32) {
    %c0_i32 = arith.constant 0 : i32
    %c0_i32_0 = arith.constant 0 : i32
    %c0_i32_1 = arith.constant 0 : i32
    return %arg1, %c0_i32, %c0_i32_0 : i32, i32, i32
  }
  func.func @transform_8(%arg0: i32, %arg1: i32) -> (i32, i32) {
    %c0_i32 = arith.constant 0 : i32
    %c0_i32_0 = arith.constant 0 : i32
    %c0_i32_1 = arith.constant 0 : i32
    return %c0_i32, %c0_i32_0 : i32, i32
  }
  func.func @transform_9(%arg0: i32, %arg1: i32) -> (i32, i32, i32) {
    %c0_i32 = arith.constant 0 : i32
    %c0_i32_0 = arith.constant 0 : i32
    %c0_i32_1 = arith.constant 0 : i32
    return %arg0, %c0_i32, %c0_i32_0 : i32, i32, i32
  }
}

</mosaic_0001>

<llo_original>
// kernel: tpu_custom_call.1
$region0: #{tpu_custom_call.1}
  #allocation0 [shape = 'u32[]', space=smem, size = 0x4, offset = 0x4, fixed_abs, tag = 'smem constant byte address 0x4 - core index']
  #allocation1 [shape = 'u32[72,128]{1,0:T(1,128)}', space=vmem, size = 0x9000, scoped, tag = 'internal scratch']
  #allocation2 [shape = 'f32[16,128]{1,0:T(8,128)}', space=vmem, size = 0x2000, scoped, tag = 'scratch operand']
  %s0 = inlined_call_operand.vmem [shape: f32[2,16,128], index: 0, kind: input, shape index: {}]
  %s1 = inlined_call_operand.vmem [shape: f32[4,128,32], index: 1, kind: input, shape index: {}]
  %s2 = inlined_call_operand.vmem [shape: f32[4,128,32], index: 2, kind: input, shape index: {}]
  %s3 = inlined_call_operand.vmem [shape: f32[4,128,32], index: 3, kind: input, shape index: {}]
  %s4 = inlined_call_operand.vmem [shape: f32[4,1,32], index: 4, kind: input, shape index: {}]
  %s5 = inlined_call_operand.vmem [shape: f32[4,1,32], index: 5, kind: input, shape index: {}]
  %s6 = inlined_call_operand.vmem [shape: f32[4,1,32], index: 6, kind: input, shape index: {}]
  %s7 = inlined_call_operand.vmem [shape: f32[4,32,128], index: 7, kind: input, shape index: {}]
  %s8 = inlined_call_operand.vmem [shape: f32[1,128], index: 8, kind: input, shape index: {}]
  %s9 = inlined_call_operand.hbm [shape: f32[2,16,128], index: 9, kind: output, shape index: {}]
  %s10 = sld [smem:[#allocation0]]
  $region77: #{tpu_custom_call.1} parent=0
    _
  %s12 = ssub.s32 1, %s10
  %s13 = scalar_select 0, %s12, %s10
  $region1: #{tpu_custom_call.1} parent=0
    #allocation3 [shape = 'u8[16384]{0}', space=vmem, size = 0x4000, scoped, tag = 'output window, operand 0']
    #allocation4 [shape = 's32[2]{0}', space=sflag, size = 0x8, scoped, tag = 'scoped memory for tpu_custom_call.1']
    %14 = vsyncpa [#allocation4], 0
    %s15 = scalar_lea.sflag [#allocation4], 1
    %16 = vsyncpa %s15, 0
    loop: start=0, step=1, limit=10
    $region2: #{tpu_custom_call.1} parent=1 // loop_pre_header
      _
    $region3: #{tpu_custom_call.1} parent=1 // loop_header
      %s18 = sphi 0, %s22
      %p19 = scmp.ge.s32.totalorder %s18, 10
      %s25 = sphi 0, %s37
      %s26 = sphi 0, %s33
      %s27 = sphi 0, %s25
      %s28 = sphi 0, %s26
      %s29 = sphi 0, %s27
      %s30 = sphi 0, %s28
      %s40 = sphi 0, %s42
      %s43 = sphi 0, %s40
      %s44 = sphi 0, %s43
      %s60 = sphi 0, %s44
      %s66 = sphi 0, %s68
      %s69 = sphi 0, %s66
      %s70 = sphi 0, %s69
      %s86 = sphi 0, %s70
      %s92 = sphi 0, %s94
      %s95 = sphi 0, %s92
      %s96 = sphi 0, %s95
      %s112 = sphi 0, %s96
      %s118 = sphi 0, %s120
      %s121 = sphi 0, %s118
      %s122 = sphi 0, %s121
      %s138 = sphi 0, %s122
      %s144 = sphi 0, %s146
      %s147 = sphi 0, %s144
      %s148 = sphi 0, %s147
      %s164 = sphi 0, %s148
      %s170 = sphi 0, %s172
      %s173 = sphi 0, %s170
      %s174 = sphi 0, %s173
      %s190 = sphi 0, %s174
      %s196 = sphi 0, %s198
      %s199 = sphi 0, %s196
      %s200 = sphi 0, %s199
      %s216 = sphi 0, %s200
      %s222 = sphi 0, %s224
      %s225 = sphi 0, %s222
      %s226 = sphi 0, %s225
      %s242 = sphi 0, %s226
      %s246 = sphi 0, %s246
      %s248 = sphi 0, %s246
      %s249 = sphi 0, %s248
      %s263 = sphi 0, %s249
      %s269 = sphi 0, %s271
      %s272 = sphi 0, %s269
      %s273 = sphi 0, %s272
      %s289 = sphi 0, %s273
    $region4: #{tpu_custom_call.1} parent=1 // loop_header_branch
      %21 = sbr.rel (%p19) target = $region8
    $region5: #{tpu_custom_call.1} parent=1 // loop_body
      %s23 = ssub.s32 %s18, 1
      %s24 = ssub.s32 %s18, 2
      %s31 = sadd.s32 1, %s26
      %p32 = scmp.ge.s32.totalorder %s31, 4
      %s33 = scalar_select %p32, 0, %s31
      %s34 = sadd.s32 1, %s25
      %s35 = scalar_select %p32, %s34, %s25
      %p36 = scmp.ge.s32.totalorder %s35, 2
      %s37 = scalar_select %p36, 0, %s35
      %s38 = ssub.s32 %s25, %s37
      %p39 = scmp.eq.s32.totalorder %s38, 0
      %s41 = sadd.s32 %s40, 1
      %s42 = scalar_select %p39, %s40, %s41
      %p45 = pneg %p39
      %p46 = scmp.eq.s32.totalorder %s18, 7
      %p47 = por %p45, %p46
      %p48 = scmp.ne.s32.totalorder %s40, %s43
      %p49 = scmp.eq.s32.totalorder %s18, 0
      %p50 = por %p48, %p49
      %p51 = scmp.ne.s32.totalorder %s40, %s43
      %p52 = scmp.eq.s32.totalorder %s23, 7
      %p53 = por %p51, %p52
      %p54 = scmp.ne.s32.totalorder %s43, %s44
      %p55 = scmp.eq.s32.totalorder %s23, 0
      %p56 = por %p54, %p55
      %p57 = scmp.ne.s32.totalorder %s43, %s44
      %p58 = scmp.eq.s32.totalorder %s24, 7
      %p59 = por %p57, %p58
      %p61 = scmp.ne.s32.totalorder %s44, %s60
      %p62 = scmp.eq.s32.totalorder %s24, 0
      %p63 = por %p61, %p62
      %s64 = ssub.s32 %s26, %s33
      %p65 = scmp.eq.s32.totalorder %s64, 0
      %s67 = sadd.s32 %s66, 1
      %s68 = scalar_select %p65, %s66, %s67
      %p71 = pneg %p65
      %p72 = scmp.eq.s32.totalorder %s18, 7
      %p73 = por %p71, %p72
      %p74 = scmp.ne.s32.totalorder %s66, %s69
      %p75 = scmp.eq.s32.totalorder %s18, 0
      %p76 = por %p74, %p75
      %p77 = scmp.ne.s32.totalorder %s66, %s69
      %p78 = scmp.eq.s32.totalorder %s23, 7
      %p79 = por %p77, %p78
      %p80 = scmp.ne.s32.totalorder %s69, %s70
      %p81 = scmp.eq.s32.totalorder %s23, 0
      %p82 = por %p80, %p81
      %p83 = scmp.ne.s32.totalorder %s69, %s70
      %p84 = scmp.eq.s32.totalorder %s24, 7
      %p85 = por %p83, %p84
      %p87 = scmp.ne.s32.totalorder %s70, %s86
      %p88 = scmp.eq.s32.totalorder %s24, 0
      %p89 = por %p87, %p88
      %s90 = ssub.s32 %s26, %s33
      %p91 = scmp.eq.s32.totalorder %s90, 0
      %s93 = sadd.s32 %s92, 1
      %s94 = scalar_select %p91, %s92, %s93
      %p97 = pneg %p91
      %p98 = scmp.eq.s32.totalorder %s18, 7
      %p99 = por %p97, %p98
      %p100 = scmp.ne.s32.totalorder %s92, %s95
      %p101 = scmp.eq.s32.totalorder %s18, 0
      %p102 = por %p100, %p101
      %p103 = scmp.ne.s32.totalorder %s92, %s95
      %p104 = scmp.eq.s32.totalorder %s23, 7
      %p105 = por %p103, %p104
      %p106 = scmp.ne.s32.totalorder %s95, %s96
      %p107 = scmp.eq.s32.totalorder %s23, 0
      %p108 = por %p106, %p107
      %p109 = scmp.ne.s32.totalorder %s95, %s96
      %p110 = scmp.eq.s32.totalorder %s24, 7
      %p111 = por %p109, %p110
      %p113 = scmp.ne.s32.totalorder %s96, %s112
      %p114 = scmp.eq.s32.totalorder %s24, 0
      %p115 = por %p113, %p114
      %s116 = ssub.s32 %s26, %s33
      %p117 = scmp.eq.s32.totalorder %s116, 0
      %s119 = sadd.s32 %s118, 1
      %s120 = scalar_select %p117, %s118, %s119
      %p123 = pneg %p117
      %p124 = scmp.eq.s32.totalorder %s18, 7
      %p125 = por %p123, %p124
      %p126 = scmp.ne.s32.totalorder %s118, %s121
      %p127 = scmp.eq.s32.totalorder %s18, 0
      %p128 = por %p126, %p127
      %p129 = scmp.ne.s32.totalorder %s118, %s121
      %p130 = scmp.eq.s32.totalorder %s23, 7
      %p131 = por %p129, %p130
      %p132 = scmp.ne.s32.totalorder %s121, %s122
      %p133 = scmp.eq.s32.totalorder %s23, 0
      %p134 = por %p132, %p133
      %p135 = scmp.ne.s32.totalorder %s121, %s122
      %p136 = scmp.eq.s32.totalorder %s24, 7
      %p137 = por %p135, %p136
      %p139 = scmp.ne.s32.totalorder %s122, %s138
      %p140 = scmp.eq.s32.totalorder %s24, 0
      %p141 = por %p139, %p140
      %s142 = ssub.s32 %s26, %s33
      %p143 = scmp.eq.s32.totalorder %s142, 0
      %s145 = sadd.s32 %s144, 1
      %s146 = scalar_select %p143, %s144, %s145
      %p149 = pneg %p143
      %p150 = scmp.eq.s32.totalorder %s18, 7
      %p151 = por %p149, %p150
      %p152 = scmp.ne.s32.totalorder %s144, %s147
      %p153 = scmp.eq.s32.totalorder %s18, 0
      %p154 = por %p152, %p153
      %p155 = scmp.ne.s32.totalorder %s144, %s147
      %p156 = scmp.eq.s32.totalorder %s23, 7
      %p157 = por %p155, %p156
      %p158 = scmp.ne.s32.totalorder %s147, %s148
      %p159 = scmp.eq.s32.totalorder %s23, 0
      %p160 = por %p158, %p159
      %p161 = scmp.ne.s32.totalorder %s147, %s148
      %p162 = scmp.eq.s32.totalorder %s24, 7
      %p163 = por %p161, %p162
      %p165 = scmp.ne.s32.totalorder %s148, %s164
      %p166 = scmp.eq.s32.totalorder %s24, 0
      %p167 = por %p165, %p166
      %s168 = ssub.s32 %s26, %s33
      %p169 = scmp.eq.s32.totalorder %s168, 0
      %s171 = sadd.s32 %s170, 1
      %s172 = scalar_select %p169, %s170, %s171
      %p175 = pneg %p169
      %p176 = scmp.eq.s32.totalorder %s18, 7
      %p177 = por %p175, %p176
      %p178 = scmp.ne.s32.totalorder %s170, %s173
      %p179 = scmp.eq.s32.totalorder %s18, 0
      %p180 = por %p178, %p179
      %p181 = scmp.ne.s32.totalorder %s170, %s173
      %p182 = scmp.eq.s32.totalorder %s23, 7
      %p183 = por %p181, %p182
      %p184 = scmp.ne.s32.totalorder %s173, %s174
      %p185 = scmp.eq.s32.totalorder %s23, 0
      %p186 = por %p184, %p185
      %p187 = scmp.ne.s32.totalorder %s173, %s174
      %p188 = scmp.eq.s32.totalorder %s24, 7
      %p189 = por %p187, %p188
      %p191 = scmp.ne.s32.totalorder %s174, %s190
      %p192 = scmp.eq.s32.totalorder %s24, 0
      %p193 = por %p191, %p192
      %s194 = ssub.s32 %s26, %s33
      %p195 = scmp.eq.s32.totalorder %s194, 0
      %s197 = sadd.s32 %s196, 1
      %s198 = scalar_select %p195, %s196, %s197
      %p201 = pneg %p195
      %p202 = scmp.eq.s32.totalorder %s18, 7
      %p203 = por %p201, %p202
      %p204 = scmp.ne.s32.totalorder %s196, %s199
      %p205 = scmp.eq.s32.totalorder %s18, 0
      %p206 = por %p204, %p205
      %p207 = scmp.ne.s32.totalorder %s196, %s199
      %p208 = scmp.eq.s32.totalorder %s23, 7
      %p209 = por %p207, %p208
      %p210 = scmp.ne.s32.totalorder %s199, %s200
      %p211 = scmp.eq.s32.totalorder %s23, 0
      %p212 = por %p210, %p211
      %p213 = scmp.ne.s32.totalorder %s199, %s200
      %p214 = scmp.eq.s32.totalorder %s24, 7
      %p215 = por %p213, %p214
      %p217 = scmp.ne.s32.totalorder %s200, %s216
      %p218 = scmp.eq.s32.totalorder %s24, 0
      %p219 = por %p217, %p218
      %s220 = ssub.s32 %s26, %s33
      %p221 = scmp.eq.s32.totalorder %s220, 0
      %s223 = sadd.s32 %s222, 1
      %s224 = scalar_select %p221, %s222, %s223
      %p227 = pneg %p221
      %p228 = scmp.eq.s32.totalorder %s18, 7
      %p229 = por %p227, %p228
      %p230 = scmp.ne.s32.totalorder %s222, %s225
      %p231 = scmp.eq.s32.totalorder %s18, 0
      %p232 = por %p230, %p231
      %p233 = scmp.ne.s32.totalorder %s222, %s225
      %p234 = scmp.eq.s32.totalorder %s23, 7
      %p235 = por %p233, %p234
      %p236 = scmp.ne.s32.totalorder %s225, %s226
      %p237 = scmp.eq.s32.totalorder %s23, 0
      %p238 = por %p236, %p237
      %p239 = scmp.ne.s32.totalorder %s225, %s226
      %p240 = scmp.eq.s32.totalorder %s24, 7
      %p241 = por %p239, %p240
      %p243 = scmp.ne.s32.totalorder %s226, %s242
      %p244 = scmp.eq.s32.totalorder %s24, 0
      %p245 = por %p243, %p244
      %s247 = sadd.s32 %s246, 1
      %p250 = scmp.eq.s32.totalorder %s18, 7
      %p251 = scmp.ne.s32.totalorder %s246, %s248
      %p252 = scmp.eq.s32.totalorder %s18, 0
      %p253 = por %p251, %p252
      %p254 = scmp.ne.s32.totalorder %s246, %s248
      %p255 = scmp.eq.s32.totalorder %s23, 7
      %p256 = por %p254, %p255
      %p257 = scmp.ne.s32.totalorder %s248, %s249
      %p258 = scmp.eq.s32.totalorder %s23, 0
      %p259 = por %p257, %p258
      %p260 = scmp.ne.s32.totalorder %s248, %s249
      %p261 = scmp.eq.s32.totalorder %s24, 7
      %p262 = por %p260, %p261
      %p264 = scmp.ne.s32.totalorder %s249, %s263
      %p265 = scmp.eq.s32.totalorder %s24, 0
      %p266 = por %p264, %p265
      %s267 = ssub.s32 %s25, %s37
      %p268 = scmp.eq.s32.totalorder %s267, 0
      %s270 = sadd.s32 %s269, 1
      %s271 = scalar_select %p268, %s269, %s270
      %p274 = pneg %p268
      %p275 = scmp.eq.s32.totalorder %s18, 7
      %p276 = por %p274, %p275
      %p277 = scmp.ne.s32.totalorder %s269, %s272
      %p278 = scmp.eq.s32.totalorder %s18, 0
      %p279 = por %p277, %p278
      %p280 = scmp.ne.s32.totalorder %s269, %s272
      %p281 = scmp.eq.s32.totalorder %s23, 7
      %p282 = por %p280, %p281
      %p283 = scmp.ne.s32.totalorder %s272, %s273
      %p284 = scmp.eq.s32.totalorder %s23, 0
      %p285 = por %p283, %p284
      %p286 = scmp.ne.s32.totalorder %s272, %s273
      %p287 = scmp.eq.s32.totalorder %s24, 7
      %p288 = por %p286, %p287
      %p290 = scmp.ne.s32.totalorder %s273, %s289
      %p291 = scmp.eq.s32.totalorder %s24, 0
      %p292 = por %p290, %p291
      %p293 = scmp.le.s32.totalorder 1, %s18
      %p294 = scmp.lt.s32.totalorder %s18, 9
      %p295 = pnand %p293, %p294
      %p296 = pneg %p295
      // Predicated region
      $region9: #{tpu_custom_call.1} parent=5 // pred_check
        _
      $region10: #{tpu_custom_call.1} parent=5 // pred_check_branch
        %298 = sbr.rel (%p295) target = $region12
      $region11: #{tpu_custom_call.1} parent=5 // pred_region
        %s299 = ssub.s32 %s18, 1
        // Predicated region
        $region13: #{tpu_custom_call.1} parent=11 // pred_check
          %p300 = pneg %p259
        $region14: #{tpu_custom_call.1} parent=11 // pred_check_branch
          %302 = sbr.rel (%p300) target = $region16
        $region15: #{tpu_custom_call.1} parent=11 // pred_region
          _
        $region16: #{tpu_custom_call.1} parent=11 // pred_fallthru
          _
      $region12: #{tpu_custom_call.1} parent=5 // pred_fallthru
        _
      %p303 = scmp.lt.s32.totalorder %s18, 8
      // Predicated region
      $region17: #{tpu_custom_call.1} parent=5 // pred_check
        %p304 = pneg %p303
      $region18: #{tpu_custom_call.1} parent=5 // pred_check_branch
        %306 = sbr.rel (%p304) target = $region20
      $region19: #{tpu_custom_call.1} parent=5 // pred_region
        // Predicated region
        $region21: #{tpu_custom_call.1} parent=19 // pred_check
          %p307 = pneg %p50
        $region22: #{tpu_custom_call.1} parent=19 // pred_check_branch
          %309 = sbr.rel (%p307) target = $region24
        $region23: #{tpu_custom_call.1} parent=19 // pred_region
          %p310 = scmp.lt.s32.totalorder %s25, 1
          %s311 = scalar_select %p310, %s25, 1
          %s312 = smul.addr %s311, 2
          %s313 = smul.addr %s312, 8
          %s314 = scalar_lea.vmem %s0, %s313
        $region24: #{tpu_custom_call.1} parent=19 // pred_fallthru
          _
        // Predicated region
        $region25: #{tpu_custom_call.1} parent=19 // pred_check
          %p315 = pneg %p76
        $region26: #{tpu_custom_call.1} parent=19 // pred_check_branch
          %317 = sbr.rel (%p315) target = $region28
        $region27: #{tpu_custom_call.1} parent=19 // pred_region
          %p318 = scmp.lt.s32.totalorder %s26, 3
          %s319 = scalar_select %p318, %s26, 3
          %s320 = smul.addr %s319, 16
          %s321 = smul.addr %s320, 8
          %s322 = scalar_lea.vmem %s1, %s321
        $region28: #{tpu_custom_call.1} parent=19 // pred_fallthru
          _
        // Predicated region
        $region29: #{tpu_custom_call.1} parent=19 // pred_check
          %p323 = pneg %p102
        $region30: #{tpu_custom_call.1} parent=19 // pred_check_branch
          %325 = sbr.rel (%p323) target = $region32
        $region31: #{tpu_custom_call.1} parent=19 // pred_region
          %p326 = scmp.lt.s32.totalorder %s26, 3
          %s327 = scalar_select %p326, %s26, 3
          %s328 = smul.addr %s327, 16
          %s329 = smul.addr %s328, 8
          %s330 = scalar_lea.vmem %s2, %s329
        $region32: #{tpu_custom_call.1} parent=19 // pred_fallthru
          _
        // Predicated region
        $region33: #{tpu_custom_call.1} parent=19 // pred_check
          %p331 = pneg %p128
        $region34: #{tpu_custom_call.1} parent=19 // pred_check_branch
          %333 = sbr.rel (%p331) target = $region36
        $region35: #{tpu_custom_call.1} parent=19 // pred_region
          %p334 = scmp.lt.s32.totalorder %s26, 3
          %s335 = scalar_select %p334, %s26, 3
          %s336 = smul.addr %s335, 16
          %s337 = smul.addr %s336, 8
          %s338 = scalar_lea.vmem %s3, %s337
        $region36: #{tpu_custom_call.1} parent=19 // pred_fallthru
          _
        // Predicated region
        $region37: #{tpu_custom_call.1} parent=19 // pred_check
          %p339 = pneg %p154
        $region38: #{tpu_custom_call.1} parent=19 // pred_check_branch
          %341 = sbr.rel (%p339) target = $region40
        $region39: #{tpu_custom_call.1} parent=19 // pred_region
          %p342 = scmp.lt.s32.totalorder %s26, 3
          %s343 = scalar_select %p342, %s26, 3
          %s344 = scalar_lea.vmem %s4, %s343
        $region40: #{tpu_custom_call.1} parent=19 // pred_fallthru
          _
        // Predicated region
        $region41: #{tpu_custom_call.1} parent=19 // pred_check
          %p345 = pneg %p180
        $region42: #{tpu_custom_call.1} parent=19 // pred_check_branch
          %347 = sbr.rel (%p345) target = $region44
        $region43: #{tpu_custom_call.1} parent=19 // pred_region
          %p348 = scmp.lt.s32.totalorder %s26, 3
          %s349 = scalar_select %p348, %s26, 3
          %s350 = scalar_lea.vmem %s5, %s349
        $region44: #{tpu_custom_call.1} parent=19 // pred_fallthru
          _
        // Predicated region
        $region45: #{tpu_custom_call.1} parent=19 // pred_check
          %p351 = pneg %p206
        $region46: #{tpu_custom_call.1} parent=19 // pred_check_branch
          %353 = sbr.rel (%p351) target = $region48
        $region47: #{tpu_custom_call.1} parent=19 // pred_region
          %p354 = scmp.lt.s32.totalorder %s26, 3
          %s355 = scalar_select %p354, %s26, 3
          %s356 = scalar_lea.vmem %s6, %s355
        $region48: #{tpu_custom_call.1} parent=19 // pred_fallthru
          _
        // Predicated region
        $region49: #{tpu_custom_call.1} parent=19 // pred_check
          %p357 = pneg %p232
        $region50: #{tpu_custom_call.1} parent=19 // pred_check_branch
          %359 = sbr.rel (%p357) target = $region52
        $region51: #{tpu_custom_call.1} parent=19 // pred_region
          %p360 = scmp.lt.s32.totalorder %s26, 3
          %s361 = scalar_select %p360, %s26, 3
          %s362 = smul.addr %s361, 4
          %s363 = smul.addr %s362, 8
          %s364 = scalar_lea.vmem %s7, %s363
        $region52: #{tpu_custom_call.1} parent=19 // pred_fallthru
          _
      $region20: #{tpu_custom_call.1} parent=5 // pred_fallthru
        _
      %p365 = scmp.le.s32.totalorder 1, %s18
      %p366 = scmp.lt.s32.totalorder %s18, 9
      %p367 = pnand %p365, %p366
      %p368 = pneg %p367
      // Predicated region
      $region53: #{tpu_custom_call.1} parent=5 // pred_check
        _
      $region54: #{tpu_custom_call.1} parent=5 // pred_check_branch
        %370 = sbr.rel (%p367) target = $region56
      $region55: #{tpu_custom_call.1} parent=5 // pred_region
        %s371 = ssub.s32 %s18, 1
        %p372 = scmp.lt.s32.totalorder %s27, 1
        %s373 = scalar_select %p372, %s27, 1
        %s374 = smul.addr %s373, 2
        %s375 = smul.addr %s374, 8
        %s376 = scalar_lea.vmem %s0, %s375
        %p377 = pneg %p56
        %p378 = pneg %p53
        %p379 = scmp.lt.s32.totalorder %s28, 3
        %s380 = scalar_select %p379, %s28, 3
        %s381 = smul.addr %s380, 16
        %s382 = smul.addr %s381, 8
        %s383 = scalar_lea.vmem %s1, %s382
        %p384 = pneg %p82
        %p385 = pneg %p79
        %p386 = scmp.lt.s32.totalorder %s28, 3
        %s387 = scalar_select %p386, %s28, 3
        %s388 = smul.addr %s387, 16
        %s389 = smul.addr %s388, 8
        %s390 = scalar_lea.vmem %s2, %s389
        %p391 = pneg %p108
        %p392 = pneg %p105
        %p393 = scmp.lt.s32.totalorder %s28, 3
        %s394 = scalar_select %p393, %s28, 3
        %s395 = smul.addr %s394, 16
        %s396 = smul.addr %s395, 8
        %s397 = scalar_lea.vmem %s3, %s396
        %p398 = pneg %p134
        %p399 = pneg %p131
        %p400 = scmp.lt.s32.totalorder %s28, 3
        %s401 = scalar_select %p400, %s28, 3
        %s402 = scalar_lea.vmem %s4, %s401
        %p403 = pneg %p160
        %p404 = pneg %p157
        %p405 = scmp.lt.s32.totalorder %s28, 3
        %s406 = scalar_select %p405, %s28, 3
        %s407 = scalar_lea.vmem %s5, %s406
        %p408 = pneg %p186
        %p409 = pneg %p183
        %p410 = scmp.lt.s32.totalorder %s28, 3
        %s411 = scalar_select %p410, %s28, 3
        %s412 = scalar_lea.vmem %s6, %s411
        %p413 = pneg %p212
        %p414 = pneg %p209
        %p415 = scmp.lt.s32.totalorder %s28, 3
        %s416 = scalar_select %p415, %s28, 3
        %s417 = smul.addr %s416, 4
        %s418 = smul.addr %s417, 8
        %s419 = scalar_lea.vmem %s7, %s418
        %p420 = pneg %p238
        %p421 = pneg %p235
        %p422 = pneg %p259
        %p423 = pneg %p256
        %p424 = pneg %p285
        %p425 = pneg %p282
        %s426 = sand.u32 %s272, 1
        %s427 = scalar_lea.sflag [#allocation4], %s426
        %s428 = sand.u32 %s272, 1
        %s429 = smul.addr %s428, 16
        %s430 = scalar_lea.vmem [#allocation3], %s429
        %p431 = scmp.lt.s32.totalorder %s27, 1
        %s432 = scalar_select %p431, %s27, 1
        %s433 = smul.addr %s432, 2
        %s434 = smul.addr %s433, 8
        %s435 = scalar_lea.vmem %s0, %s434
        %p436 = scmp.lt.s32.totalorder %s28, 3
        %s437 = scalar_select %p436, %s28, 3
        %s438 = smul.addr %s437, 16
        %s439 = smul.addr %s438, 8
        %s440 = scalar_lea.vmem %s1, %s439
        %p441 = scmp.lt.s32.totalorder %s28, 3
        %s442 = scalar_select %p441, %s28, 3
        %s443 = smul.addr %s442, 16
        %s444 = smul.addr %s443, 8
        %s445 = scalar_lea.vmem %s2, %s444
        %p446 = scmp.lt.s32.totalorder %s28, 3
        %s447 = scalar_select %p446, %s28, 3
        %s448 = smul.addr %s447, 16
        %s449 = smul.addr %s448, 8
        %s450 = scalar_lea.vmem %s3, %s449
        %p451 = scmp.lt.s32.totalorder %s28, 3
        %s452 = scalar_select %p451, %s28, 3
        %s453 = scalar_lea.vmem %s4, %s452
        %p454 = scmp.lt.s32.totalorder %s28, 3
        %s455 = scalar_select %p454, %s28, 3
        %s456 = scalar_lea.vmem %s5, %s455
        %p457 = scmp.lt.s32.totalorder %s28, 3
        %s458 = scalar_select %p457, %s28, 3
        %s459 = scalar_lea.vmem %s6, %s458
        %p460 = scmp.lt.s32.totalorder %s28, 3
        %s461 = scalar_select %p460, %s28, 3
        %s462 = smul.addr %s461, 4
        %s463 = smul.addr %s462, 8
        %s464 = scalar_lea.vmem %s7, %s463
        %p465 = scmp.eq.s32.totalorder %s28, 0
        // Predicated region
        $region57: #{tpu_custom_call.1} parent=55 // pred_check
          %p466 = pneg %p465
        $region58: #{tpu_custom_call.1} parent=55 // pred_check_branch
          %468 = sbr.rel (%p466) target = $region60
        $region59: #{tpu_custom_call.1} parent=55 // pred_region
          %v469 = vld [vmem:[%s8] sm:$0x1]
          %v471 = vperm.slane %v469, 0
          %473 = vst [vmem:[#allocation2] sm:$0xff] %v471
          %474 = vst [vmem:[#allocation2 + $0x8] sm:$0xff] %v471
        $region60: #{tpu_custom_call.1} parent=55 // pred_fallthru
          _
        %v475 = vld [vmem:[%s435] sm:$0xff]
        %v476 = vld [vmem:[%s435 + $0x8] sm:$0xff]
        %v477 = vld [vmem:[%s440] sm:$0xff]
        %v478 = vld [vmem:[%s440 + $0x8] sm:$0xff]
        %v479 = vld [vmem:[%s440 + $0x10] sm:$0xff]
        %v480 = vld [vmem:[%s440 + $0x18] sm:$0xff]
        %v481 = vld [vmem:[%s440 + $0x20] sm:$0xff]
        %v482 = vld [vmem:[%s440 + $0x28] sm:$0xff]
        %v483 = vld [vmem:[%s440 + $0x30] sm:$0xff]
        %v484 = vld [vmem:[%s440 + $0x38] sm:$0xff]
        %v485 = vld [vmem:[%s440 + $0x40] sm:$0xff]
        %v486 = vld [vmem:[%s440 + $0x48] sm:$0xff]
        %v487 = vld [vmem:[%s440 + $0x50] sm:$0xff]
        %v488 = vld [vmem:[%s440 + $0x58] sm:$0xff]
        %v489 = vld [vmem:[%s440 + $0x60] sm:$0xff]
        %v490 = vld [vmem:[%s440 + $0x68] sm:$0xff]
        %v491 = vld [vmem:[%s440 + $0x70] sm:$0xff]
        %v492 = vld [vmem:[%s440 + $0x78] sm:$0xff]
        %v493 = vld [vmem:[%s453] sm:$0x1]
        %v495 = vperm.slane %v493, 0
        %v497 = vand.u32 %v492, 4294901760
        %498 = vmatpush.msra.mxu0 %v497
        %v499 = vand.u32 %v491, 4294901760
        %500 = vmatpush.msra.mxu0 %v499
        %v501 = vand.u32 %v490, 4294901760
        %502 = vmatpush.msra.mxu0 %v501
        %v503 = vand.u32 %v489, 4294901760
        %504 = vmatpush.msra.mxu0 %v503
        %v505 = vand.u32 %v488, 4294901760
        %506 = vmatpush.msra.mxu0 %v505
        %v507 = vand.u32 %v487, 4294901760
        %508 = vmatpush.msra.mxu0 %v507
        %v509 = vand.u32 %v486, 4294901760
        %510 = vmatpush.msra.mxu0 %v509
        %v511 = vand.u32 %v485, 4294901760
        %512 = vmatpush.msra.mxu0 %v511
        %v513 = vand.u32 %v484, 4294901760
        %514 = vmatpush.msra.mxu0 %v513
        %v515 = vand.u32 %v483, 4294901760
        %516 = vmatpush.msra.mxu0 %v515
        %v517 = vand.u32 %v482, 4294901760
        %518 = vmatpush.msra.mxu0 %v517
        %v519 = vand.u32 %v481, 4294901760
        %520 = vmatpush.msra.mxu0 %v519
        %v521 = vand.u32 %v480, 4294901760
        %522 = vmatpush.msra.mxu0 %v521
        %v523 = vand.u32 %v479, 4294901760
        %524 = vmatpush.msra.mxu0 %v523
        %v525 = vand.u32 %v478, 4294901760
        %526 = vmatpush.msra.mxu0 %v525
        %v527 = vand.u32 %v477, 4294901760
        %528 = vmatpush.msra.mxu0 %v527
        %v529 = vand.u32 %v475, 4294901760
        %v530 = vsub.f32 %v475, %v529
        %v531 = vand.u32 %v530, 4294901760
        %v532 = vsub.f32 %v530, %v531
        %v533 = vand.u32 %v532, 4294901760
        %534 = vmatmul.f32.gmra.mxu0 %v533
        %v535 = vpop.f32.mrf.mxu0
        %v536 = vadd.f32 %v495, %v535
        %v537 = vand.u32 %v476, 4294901760
        %v538 = vsub.f32 %v476, %v537
        %v539 = vand.u32 %v538, 4294901760
        %v540 = vsub.f32 %v538, %v539
        %v541 = vand.u32 %v540, 4294901760
        %542 = vmatmul.f32.gmra.mxu0 %v541
        %v543 = vpop.f32.mrf.mxu0
        %v544 = vadd.f32 %v495, %v543
        %545 = vdwg.mxu0
        %v546 = vand.u32 %v492, 4294901760
        %v547 = vsub.f32 %v492, %v546
        %v548 = vand.u32 %v547, 4294901760
        %v549 = vsub.f32 %v547, %v548
        %v550 = vand.u32 %v549, 4294901760
        %551 = vmatpush.msra.mxu0 %v550
        %v552 = vand.u32 %v491, 4294901760
        %v553 = vsub.f32 %v491, %v552
        %v554 = vand.u32 %v553, 4294901760
        %v555 = vsub.f32 %v553, %v554
        %v556 = vand.u32 %v555, 4294901760
        %557 = vmatpush.msra.mxu0 %v556
        %v558 = vand.u32 %v490, 4294901760
        %v559 = vsub.f32 %v490, %v558
        %v560 = vand.u32 %v559, 4294901760
        %v561 = vsub.f32 %v559, %v560
        %v562 = vand.u32 %v561, 4294901760
        %563 = vmatpush.msra.mxu0 %v562
        %v564 = vand.u32 %v489, 4294901760
        %v565 = vsub.f32 %v489, %v564
        %v566 = vand.u32 %v565, 4294901760
        %v567 = vsub.f32 %v565, %v566
        %v568 = vand.u32 %v567, 4294901760
        %569 = vmatpush.msra.mxu0 %v568
        %v570 = vand.u32 %v488, 4294901760
        %v571 = vsub.f32 %v488, %v570
        %v572 = vand.u32 %v571, 4294901760
        %v573 = vsub.f32 %v571, %v572
        %v574 = vand.u32 %v573, 4294901760
        %575 = vmatpush.msra.mxu0 %v574
        %v576 = vand.u32 %v487, 4294901760
        %v577 = vsub.f32 %v487, %v576
        %v578 = vand.u32 %v577, 4294901760
        %v579 = vsub.f32 %v577, %v578
        %v580 = vand.u32 %v579, 4294901760
        %581 = vmatpush.msra.mxu0 %v580
        %v582 = vand.u32 %v486, 4294901760
        %v583 = vsub.f32 %v486, %v582
        %v584 = vand.u32 %v583, 4294901760
        %v585 = vsub.f32 %v583, %v584
        %v586 = vand.u32 %v585, 4294901760
        %587 = vmatpush.msra.mxu0 %v586
        %v588 = vand.u32 %v485, 4294901760
        %v589 = vsub.f32 %v485, %v588
        %v590 = vand.u32 %v589, 4294901760
        %v591 = vsub.f32 %v589, %v590
        %v592 = vand.u32 %v591, 4294901760
        %593 = vmatpush.msra.mxu0 %v592
        %v594 = vand.u32 %v484, 4294901760
        %v595 = vsub.f32 %v484, %v594
        %v596 = vand.u32 %v595, 4294901760
        %v597 = vsub.f32 %v595, %v596
        %v598 = vand.u32 %v597, 4294901760
        %599 = vmatpush.msra.mxu0 %v598
        %v600 = vand.u32 %v483, 4294901760
        %v601 = vsub.f32 %v483, %v600
        %v602 = vand.u32 %v601, 4294901760
        %v603 = vsub.f32 %v601, %v602
        %v604 = vand.u32 %v603, 4294901760
        %605 = vmatpush.msra.mxu0 %v604
        %v606 = vand.u32 %v482, 4294901760
        %v607 = vsub.f32 %v482, %v606
        %v608 = vand.u32 %v607, 4294901760
        %v609 = vsub.f32 %v607, %v608
        %v610 = vand.u32 %v609, 4294901760
        %611 = vmatpush.msra.mxu0 %v610
        %v612 = vand.u32 %v481, 4294901760
        %v613 = vsub.f32 %v481, %v612
        %v614 = vand.u32 %v613, 4294901760
        %v615 = vsub.f32 %v613, %v614
        %v616 = vand.u32 %v615, 4294901760
        %617 = vmatpush.msra.mxu0 %v616
        %v618 = vand.u32 %v480, 4294901760
        %v619 = vsub.f32 %v480, %v618
        %v620 = vand.u32 %v619, 4294901760
        %v621 = vsub.f32 %v619, %v620
        %v622 = vand.u32 %v621, 4294901760
        %623 = vmatpush.msra.mxu0 %v622
        %v624 = vand.u32 %v479, 4294901760
        %v625 = vsub.f32 %v479, %v624
        %v626 = vand.u32 %v625, 4294901760
        %v627 = vsub.f32 %v625, %v626
        %v628 = vand.u32 %v627, 4294901760
        %629 = vmatpush.msra.mxu0 %v628
        %v630 = vand.u32 %v478, 4294901760
        %v631 = vsub.f32 %v478, %v630
        %v632 = vand.u32 %v631, 4294901760
        %v633 = vsub.f32 %v631, %v632
        %v634 = vand.u32 %v633, 4294901760
        %635 = vmatpush.msra.mxu0 %v634
        %v636 = vand.u32 %v477, 4294901760
        %v637 = vsub.f32 %v477, %v636
        %v638 = vand.u32 %v637, 4294901760
        %v639 = vsub.f32 %v637, %v638
        %v640 = vand.u32 %v639, 4294901760
        %641 = vmatpush.msra.mxu0 %v640
        %v642 = vand.u32 %v475, 4294901760
        %643 = vmatmul.f32.gmra.mxu0 %v642
        %v644 = vpop.f32.mrf.mxu0
        %v645 = vadd.f32 %v536, %v644
        %v646 = vand.u32 %v476, 4294901760
        %647 = vmatmul.f32.gmra.mxu0 %v646
        %v648 = vpop.f32.mrf.mxu0
        %v649 = vadd.f32 %v544, %v648
        %650 = vdwg.mxu0
        %v651 = vand.u32 %v492, 4294901760
        %v652 = vsub.f32 %v492, %v651
        %653 = vmatpush.msra.mxu0 %v652
        %v654 = vand.u32 %v491, 4294901760
        %v655 = vsub.f32 %v491, %v654
        %656 = vmatpush.msra.mxu0 %v655
        %v657 = vand.u32 %v490, 4294901760
        %v658 = vsub.f32 %v490, %v657
        %659 = vmatpush.msra.mxu0 %v658
        %v660 = vand.u32 %v489, 4294901760
        %v661 = vsub.f32 %v489, %v660
        %662 = vmatpush.msra.mxu0 %v661
        %v663 = vand.u32 %v488, 4294901760
        %v664 = vsub.f32 %v488, %v663
        %665 = vmatpush.msra.mxu0 %v664
        %v666 = vand.u32 %v487, 4294901760
        %v667 = vsub.f32 %v487, %v666
        %668 = vmatpush.msra.mxu0 %v667
        %v669 = vand.u32 %v486, 4294901760
        %v670 = vsub.f32 %v486, %v669
        %671 = vmatpush.msra.mxu0 %v670
        %v672 = vand.u32 %v485, 4294901760
        %v673 = vsub.f32 %v485, %v672
        %674 = vmatpush.msra.mxu0 %v673
        %v675 = vand.u32 %v484, 4294901760
        %v676 = vsub.f32 %v484, %v675
        %677 = vmatpush.msra.mxu0 %v676
        %v678 = vand.u32 %v483, 4294901760
        %v679 = vsub.f32 %v483, %v678
        %680 = vmatpush.msra.mxu0 %v679
        %v681 = vand.u32 %v482, 4294901760
        %v682 = vsub.f32 %v482, %v681
        %683 = vmatpush.msra.mxu0 %v682
        %v684 = vand.u32 %v481, 4294901760
        %v685 = vsub.f32 %v481, %v684
        %686 = vmatpush.msra.mxu0 %v685
        %v687 = vand.u32 %v480, 4294901760
        %v688 = vsub.f32 %v480, %v687
        %689 = vmatpush.msra.mxu0 %v688
        %v690 = vand.u32 %v479, 4294901760
        %v691 = vsub.f32 %v479, %v690
        %692 = vmatpush.msra.mxu0 %v691
        %v693 = vand.u32 %v478, 4294901760
        %v694 = vsub.f32 %v478, %v693
        %695 = vmatpush.msra.mxu0 %v694
        %v696 = vand.u32 %v477, 4294901760
        %v697 = vsub.f32 %v477, %v696
        %698 = vmatpush.msra.mxu0 %v697
        %v699 = vand.u32 %v475, 4294901760
        %v700 = vsub.f32 %v475, %v699
        %701 = vmatmul.f32.gmra.mxu0 %v700
        %v702 = vpop.f32.mrf.mxu0
        %v703 = vadd.f32 %v645, %v702
        %v704 = vand.u32 %v476, 4294901760
        %v705 = vsub.f32 %v476, %v704
        %706 = vmatmul.f32.gmra.mxu0 %v705
        %v707 = vpop.f32.mrf.mxu0
        %v708 = vadd.f32 %v649, %v707
        %709 = vdwg.mxu0
        %v710 = vand.u32 %v492, 4294901760
        %711 = vmatpush.msra.mxu0 %v710
        %v712 = vand.u32 %v491, 4294901760
        %713 = vmatpush.msra.mxu0 %v712
        %v714 = vand.u32 %v490, 4294901760
        %715 = vmatpush.msra.mxu0 %v714
        %v716 = vand.u32 %v489, 4294901760
        %717 = vmatpush.msra.mxu0 %v716
        %v718 = vand.u32 %v488, 4294901760
        %719 = vmatpush.msra.mxu0 %v718
        %v720 = vand.u32 %v487, 4294901760
        %721 = vmatpush.msra.mxu0 %v720
        %v722 = vand.u32 %v486, 4294901760
        %723 = vmatpush.msra.mxu0 %v722
        %v724 = vand.u32 %v485, 4294901760
        %725 = vmatpush.msra.mxu0 %v724
        %v726 = vand.u32 %v484, 4294901760
        %727 = vmatpush.msra.mxu0 %v726
        %v728 = vand.u32 %v483, 4294901760
        %729 = vmatpush.msra.mxu0 %v728
        %v730 = vand.u32 %v482, 4294901760
        %731 = vmatpush.msra.mxu0 %v730
        %v732 = vand.u32 %v481, 4294901760
        %733 = vmatpush.msra.mxu0 %v732
        %v734 = vand.u32 %v480, 4294901760
        %735 = vmatpush.msra.mxu0 %v734
        %v736 = vand.u32 %v479, 4294901760
        %737 = vmatpush.msra.mxu0 %v736
        %v738 = vand.u32 %v478, 4294901760
        %739 = vmatpush.msra.mxu0 %v738
        %v740 = vand.u32 %v477, 4294901760
        %741 = vmatpush.msra.mxu0 %v740
        %v742 = vand.u32 %v475, 4294901760
        %v743 = vsub.f32 %v475, %v742
        %v744 = vand.u32 %v743, 4294901760
        %745 = vmatmul.f32.gmra.mxu0 %v744
        %v746 = vpop.f32.mrf.mxu0
        %v747 = vadd.f32 %v703, %v746
        %v748 = vand.u32 %v476, 4294901760
        %v749 = vsub.f32 %v476, %v748
        %v750 = vand.u32 %v749, 4294901760
        %751 = vmatmul.f32.gmra.mxu0 %v750
        %v752 = vpop.f32.mrf.mxu0
        %v753 = vadd.f32 %v708, %v752
        %754 = vdwg.mxu0
        %v755 = vand.u32 %v492, 4294901760
        %v756 = vsub.f32 %v492, %v755
        %v757 = vand.u32 %v756, 4294901760
        %758 = vmatpush.msra.mxu0 %v757
        %v759 = vand.u32 %v491, 4294901760
        %v760 = vsub.f32 %v491, %v759
        %v761 = vand.u32 %v760, 4294901760
        %762 = vmatpush.msra.mxu0 %v761
        %v763 = vand.u32 %v490, 4294901760
        %v764 = vsub.f32 %v490, %v763
        %v765 = vand.u32 %v764, 4294901760
        %766 = vmatpush.msra.mxu0 %v765
        %v767 = vand.u32 %v489, 4294901760
        %v768 = vsub.f32 %v489, %v767
        %v769 = vand.u32 %v768, 4294901760
        %770 = vmatpush.msra.mxu0 %v769
        %v771 = vand.u32 %v488, 4294901760
        %v772 = vsub.f32 %v488, %v771
        %v773 = vand.u32 %v772, 4294901760
        %774 = vmatpush.msra.mxu0 %v773
        %v775 = vand.u32 %v487, 4294901760
        %v776 = vsub.f32 %v487, %v775
        %v777 = vand.u32 %v776, 4294901760
        %778 = vmatpush.msra.mxu0 %v777
        %v779 = vand.u32 %v486, 4294901760
        %v780 = vsub.f32 %v486, %v779
        %v781 = vand.u32 %v780, 4294901760
        %782 = vmatpush.msra.mxu0 %v781
        %v783 = vand.u32 %v485, 4294901760
        %v784 = vsub.f32 %v485, %v783
        %v785 = vand.u32 %v784, 4294901760
        %786 = vmatpush.msra.mxu0 %v785
        %v787 = vand.u32 %v484, 4294901760
        %v788 = vsub.f32 %v484, %v787
        %v789 = vand.u32 %v788, 4294901760
        %790 = vmatpush.msra.mxu0 %v789
        %v791 = vand.u32 %v483, 4294901760
        %v792 = vsub.f32 %v483, %v791
        %v793 = vand.u32 %v792, 4294901760
        %794 = vmatpush.msra.mxu0 %v793
        %v795 = vand.u32 %v482, 4294901760
        %v796 = vsub.f32 %v482, %v795
        %v797 = vand.u32 %v796, 4294901760
        %798 = vmatpush.msra.mxu0 %v797
        %v799 = vand.u32 %v481, 4294901760
        %v800 = vsub.f32 %v481, %v799
        %v801 = vand.u32 %v800, 4294901760
        %802 = vmatpush.msra.mxu0 %v801
        %v803 = vand.u32 %v480, 4294901760
        %v804 = vsub.f32 %v480, %v803
        %v805 = vand.u32 %v804, 4294901760
        %806 = vmatpush.msra.mxu0 %v805
        %v807 = vand.u32 %v479, 4294901760
        %v808 = vsub.f32 %v479, %v807
        %v809 = vand.u32 %v808, 4294901760
        %810 = vmatpush.msra.mxu0 %v809
        %v811 = vand.u32 %v478, 4294901760
        %v812 = vsub.f32 %v478, %v811
        %v813 = vand.u32 %v812, 4294901760
        %814 = vmatpush.msra.mxu0 %v813
        %v815 = vand.u32 %v477, 4294901760
        %v816 = vsub.f32 %v477, %v815
        %v817 = vand.u32 %v816, 4294901760
        %818 = vmatpush.msra.mxu0 %v817
        %v819 = vand.u32 %v475, 4294901760
        %820 = vmatmul.f32.gmra.mxu0 %v819
        %v821 = vpop.f32.mrf.mxu0
        %v822 = vadd.f32 %v747, %v821
        %v823 = vand.u32 %v476, 4294901760
        %824 = vmatmul.f32.gmra.mxu0 %v823
        %v825 = vpop.f32.mrf.mxu0
        %v826 = vadd.f32 %v753, %v825
        %827 = vdwg.mxu0
        %v828 = vand.u32 %v492, 4294901760
        %829 = vmatpush.msra.mxu0 %v828
        %v830 = vand.u32 %v491, 4294901760
        %831 = vmatpush.msra.mxu0 %v830
        %v832 = vand.u32 %v490, 4294901760
        %833 = vmatpush.msra.mxu0 %v832
        %v834 = vand.u32 %v489, 4294901760
        %835 = vmatpush.msra.mxu0 %v834
        %v836 = vand.u32 %v488, 4294901760
        %837 = vmatpush.msra.mxu0 %v836
        %v838 = vand.u32 %v487, 4294901760
        %839 = vmatpush.msra.mxu0 %v838
        %v840 = vand.u32 %v486, 4294901760
        %841 = vmatpush.msra.mxu0 %v840
        %v842 = vand.u32 %v485, 4294901760
        %843 = vmatpush.msra.mxu0 %v842
        %v844 = vand.u32 %v484, 4294901760
        %845 = vmatpush.msra.mxu0 %v844
        %v846 = vand.u32 %v483, 4294901760
        %847 = vmatpush.msra.mxu0 %v846
        %v848 = vand.u32 %v482, 4294901760
        %849 = vmatpush.msra.mxu0 %v848
        %v850 = vand.u32 %v481, 4294901760
        %851 = vmatpush.msra.mxu0 %v850
        %v852 = vand.u32 %v480, 4294901760
        %853 = vmatpush.msra.mxu0 %v852
        %v854 = vand.u32 %v479, 4294901760
        %855 = vmatpush.msra.mxu0 %v854
        %v856 = vand.u32 %v478, 4294901760
        %857 = vmatpush.msra.mxu0 %v856
        %v858 = vand.u32 %v477, 4294901760
        %859 = vmatpush.msra.mxu0 %v858
        %v860 = vand.u32 %v475, 4294901760
        %861 = vmatmul.f32.gmra.mxu0 %v860
        %v862 = vpop.f32.mrf.mxu0
        %v863 = vadd.f32 %v822, %v862
        %v864 = vand.u32 %v476, 4294901760
        %865 = vmatmul.f32.gmra.mxu0 %v864
        %v866 = vpop.f32.mrf.mxu0
        %v867 = vadd.f32 %v826, %v866
        %868 = vdwg.mxu0
        %v869 = vld [vmem:[%s445] sm:$0xff]
        %v870 = vld [vmem:[%s445 + $0x8] sm:$0xff]
        %v871 = vld [vmem:[%s445 + $0x10] sm:$0xff]
        %v872 = vld [vmem:[%s445 + $0x18] sm:$0xff]
        %v873 = vld [vmem:[%s445 + $0x20] sm:$0xff]
        %v874 = vld [vmem:[%s445 + $0x28] sm:$0xff]
        %v875 = vld [vmem:[%s445 + $0x30] sm:$0xff]
        %v876 = vld [vmem:[%s445 + $0x38] sm:$0xff]
        %v877 = vld [vmem:[%s445 + $0x40] sm:$0xff]
        %v878 = vld [vmem:[%s445 + $0x48] sm:$0xff]
        %v879 = vld [vmem:[%s445 + $0x50] sm:$0xff]
        %v880 = vld [vmem:[%s445 + $0x58] sm:$0xff]
        %v881 = vld [vmem:[%s445 + $0x60] sm:$0xff]
        %v882 = vld [vmem:[%s445 + $0x68] sm:$0xff]
        %v883 = vld [vmem:[%s445 + $0x70] sm:$0xff]
        %v884 = vld [vmem:[%s445 + $0x78] sm:$0xff]
        %v885 = vld [vmem:[%s456] sm:$0x1]
        %v887 = vperm.slane %v885, 0
        %v889 = vand.u32 %v884, 4294901760
        %890 = vmatpush.msra.mxu0 %v889
        %v891 = vand.u32 %v883, 4294901760
        %892 = vmatpush.msra.mxu0 %v891
        %v893 = vand.u32 %v882, 4294901760
        %894 = vmatpush.msra.mxu0 %v893
        %v895 = vand.u32 %v881, 4294901760
        %896 = vmatpush.msra.mxu0 %v895
        %v897 = vand.u32 %v880, 4294901760
        %898 = vmatpush.msra.mxu0 %v897
        %v899 = vand.u32 %v879, 4294901760
        %900 = vmatpush.msra.mxu0 %v899
        %v901 = vand.u32 %v878, 4294901760
        %902 = vmatpush.msra.mxu0 %v901
        %v903 = vand.u32 %v877, 4294901760
        %904 = vmatpush.msra.mxu0 %v903
        %v905 = vand.u32 %v876, 4294901760
        %906 = vmatpush.msra.mxu0 %v905
        %v907 = vand.u32 %v875, 4294901760
        %908 = vmatpush.msra.mxu0 %v907
        %v909 = vand.u32 %v874, 4294901760
        %910 = vmatpush.msra.mxu0 %v909
        %v911 = vand.u32 %v873, 4294901760
        %912 = vmatpush.msra.mxu0 %v911
        %v913 = vand.u32 %v872, 4294901760
        %914 = vmatpush.msra.mxu0 %v913
        %v915 = vand.u32 %v871, 4294901760
        %916 = vmatpush.msra.mxu0 %v915
        %v917 = vand.u32 %v870, 4294901760
        %918 = vmatpush.msra.mxu0 %v917
        %v919 = vand.u32 %v869, 4294901760
        %920 = vmatpush.msra.mxu0 %v919
        %v921 = vand.u32 %v475, 4294901760
        %v922 = vsub.f32 %v475, %v921
        %v923 = vand.u32 %v922, 4294901760
        %v924 = vsub.f32 %v922, %v923
        %v925 = vand.u32 %v924, 4294901760
        %926 = vmatmul.f32.gmra.mxu0 %v925
        %v927 = vpop.f32.mrf.mxu0
        %v928 = vadd.f32 %v887, %v927
        %v929 = vand.u32 %v476, 4294901760
        %v930 = vsub.f32 %v476, %v929
        %v931 = vand.u32 %v930, 4294901760
        %v932 = vsub.f32 %v930, %v931
        %v933 = vand.u32 %v932, 4294901760
        %934 = vmatmul.f32.gmra.mxu0 %v933
        %v935 = vpop.f32.mrf.mxu0
        %v936 = vadd.f32 %v887, %v935
        %937 = vdwg.mxu0
        %v938 = vand.u32 %v884, 4294901760
        %v939 = vsub.f32 %v884, %v938
        %v940 = vand.u32 %v939, 4294901760
        %v941 = vsub.f32 %v939, %v940
        %v942 = vand.u32 %v941, 4294901760
        %943 = vmatpush.msra.mxu0 %v942
        %v944 = vand.u32 %v883, 4294901760
        %v945 = vsub.f32 %v883, %v944
        %v946 = vand.u32 %v945, 4294901760
        %v947 = vsub.f32 %v945, %v946
        %v948 = vand.u32 %v947, 4294901760
        %949 = vmatpush.msra.mxu0 %v948
        %v950 = vand.u32 %v882, 4294901760
        %v951 = vsub.f32 %v882, %v950
        %v952 = vand.u32 %v951, 4294901760
        %v953 = vsub.f32 %v951, %v952
        %v954 = vand.u32 %v953, 4294901760
        %955 = vmatpush.msra.mxu0 %v954
        %v956 = vand.u32 %v881, 4294901760
        %v957 = vsub.f32 %v881, %v956
        %v958 = vand.u32 %v957, 4294901760
        %v959 = vsub.f32 %v957, %v958
        %v960 = vand.u32 %v959, 4294901760
        %961 = vmatpush.msra.mxu0 %v960
        %v962 = vand.u32 %v880, 4294901760
        %v963 = vsub.f32 %v880, %v962
        %v964 = vand.u32 %v963, 4294901760
        %v965 = vsub.f32 %v963, %v964
        %v966 = vand.u32 %v965, 4294901760
        %967 = vmatpush.msra.mxu0 %v966
        %v968 = vand.u32 %v879, 4294901760
        %v969 = vsub.f32 %v879, %v968
        %v970 = vand.u32 %v969, 4294901760
        %v971 = vsub.f32 %v969, %v970
        %v972 = vand.u32 %v971, 4294901760
        %973 = vmatpush.msra.mxu0 %v972
        %v974 = vand.u32 %v878, 4294901760
        %v975 = vsub.f32 %v878, %v974
        %v976 = vand.u32 %v975, 4294901760
        %v977 = vsub.f32 %v975, %v976
        %v978 = vand.u32 %v977, 4294901760
        %979 = vmatpush.msra.mxu0 %v978
        %v980 = vand.u32 %v877, 4294901760
        %v981 = vsub.f32 %v877, %v980
        %v982 = vand.u32 %v981, 4294901760
        %v983 = vsub.f32 %v981, %v982
        %v984 = vand.u32 %v983, 4294901760
        %985 = vmatpush.msra.mxu0 %v984
        %v986 = vand.u32 %v876, 4294901760
        %v987 = vsub.f32 %v876, %v986
        %v988 = vand.u32 %v987, 4294901760
        %v989 = vsub.f32 %v987, %v988
        %v990 = vand.u32 %v989, 4294901760
        %991 = vmatpush.msra.mxu0 %v990
        %v992 = vand.u32 %v875, 4294901760
        %v993 = vsub.f32 %v875, %v992
        %v994 = vand.u32 %v993, 4294901760
        %v995 = vsub.f32 %v993, %v994
        %v996 = vand.u32 %v995, 4294901760
        %997 = vmatpush.msra.mxu0 %v996
        %v998 = vand.u32 %v874, 4294901760
        %v999 = vsub.f32 %v874, %v998
        %v1000 = vand.u32 %v999, 4294901760
        %v1001 = vsub.f32 %v999, %v1000
        %v1002 = vand.u32 %v1001, 4294901760
        %1003 = vmatpush.msra.mxu0 %v1002
        %v1004 = vand.u32 %v873, 4294901760
        %v1005 = vsub.f32 %v873, %v1004
        %v1006 = vand.u32 %v1005, 4294901760
        %v1007 = vsub.f32 %v1005, %v1006
        %v1008 = vand.u32 %v1007, 4294901760
        %1009 = vmatpush.msra.mxu0 %v1008
        %v1010 = vand.u32 %v872, 4294901760
        %v1011 = vsub.f32 %v872, %v1010
        %v1012 = vand.u32 %v1011, 4294901760
        %v1013 = vsub.f32 %v1011, %v1012
        %v1014 = vand.u32 %v1013, 4294901760
        %1015 = vmatpush.msra.mxu0 %v1014
        %v1016 = vand.u32 %v871, 4294901760
        %v1017 = vsub.f32 %v871, %v1016
        %v1018 = vand.u32 %v1017, 4294901760
        %v1019 = vsub.f32 %v1017, %v1018
        %v1020 = vand.u32 %v1019, 4294901760
        %1021 = vmatpush.msra.mxu0 %v1020
        %v1022 = vand.u32 %v870, 4294901760
        %v1023 = vsub.f32 %v870, %v1022
        %v1024 = vand.u32 %v1023, 4294901760
        %v1025 = vsub.f32 %v1023, %v1024
        %v1026 = vand.u32 %v1025, 4294901760
        %1027 = vmatpush.msra.mxu0 %v1026
        %v1028 = vand.u32 %v869, 4294901760
        %v1029 = vsub.f32 %v869, %v1028
        %v1030 = vand.u32 %v1029, 4294901760
        %v1031 = vsub.f32 %v1029, %v1030
        %v1032 = vand.u32 %v1031, 4294901760
        %1033 = vmatpush.msra.mxu0 %v1032
        %v1034 = vand.u32 %v475, 4294901760
        %1035 = vmatmul.f32.gmra.mxu0 %v1034
        %v1036 = vpop.f32.mrf.mxu0
        %v1037 = vadd.f32 %v928, %v1036
        %v1038 = vand.u32 %v476, 4294901760
        %1039 = vmatmul.f32.gmra.mxu0 %v1038
        %v1040 = vpop.f32.mrf.mxu0
        %v1041 = vadd.f32 %v936, %v1040
        %1042 = vdwg.mxu0
        %v1043 = vand.u32 %v884, 4294901760
        %v1044 = vsub.f32 %v884, %v1043
        %1045 = vmatpush.msra.mxu0 %v1044
        %v1046 = vand.u32 %v883, 4294901760
        %v1047 = vsub.f32 %v883, %v1046
        %1048 = vmatpush.msra.mxu0 %v1047
        %v1049 = vand.u32 %v882, 4294901760
        %v1050 = vsub.f32 %v882, %v1049
        %1051 = vmatpush.msra.mxu0 %v1050
        %v1052 = vand.u32 %v881, 4294901760
        %v1053 = vsub.f32 %v881, %v1052
        %1054 = vmatpush.msra.mxu0 %v1053
        %v1055 = vand.u32 %v880, 4294901760
        %v1056 = vsub.f32 %v880, %v1055
        %1057 = vmatpush.msra.mxu0 %v1056
        %v1058 = vand.u32 %v879, 4294901760
        %v1059 = vsub.f32 %v879, %v1058
        %1060 = vmatpush.msra.mxu0 %v1059
        %v1061 = vand.u32 %v878, 4294901760
        %v1062 = vsub.f32 %v878, %v1061
        %1063 = vmatpush.msra.mxu0 %v1062
        %v1064 = vand.u32 %v877, 4294901760
        %v1065 = vsub.f32 %v877, %v1064
        %1066 = vmatpush.msra.mxu0 %v1065
        %v1067 = vand.u32 %v876, 4294901760
        %v1068 = vsub.f32 %v876, %v1067
        %1069 = vmatpush.msra.mxu0 %v1068
        %v1070 = vand.u32 %v875, 4294901760
        %v1071 = vsub.f32 %v875, %v1070
        %1072 = vmatpush.msra.mxu0 %v1071
        %v1073 = vand.u32 %v874, 4294901760
        %v1074 = vsub.f32 %v874, %v1073
        %1075 = vmatpush.msra.mxu0 %v1074
        %v1076 = vand.u32 %v873, 4294901760
        %v1077 = vsub.f32 %v873, %v1076
        %1078 = vmatpush.msra.mxu0 %v1077
        %v1079 = vand.u32 %v872, 4294901760
        %v1080 = vsub.f32 %v872, %v1079
        %1081 = vmatpush.msra.mxu0 %v1080
        %v1082 = vand.u32 %v871, 4294901760
        %v1083 = vsub.f32 %v871, %v1082
        %1084 = vmatpush.msra.mxu0 %v1083
        %v1085 = vand.u32 %v870, 4294901760
        %v1086 = vsub.f32 %v870, %v1085
        %1087 = vmatpush.msra.mxu0 %v1086
        %v1088 = vand.u32 %v869, 4294901760
        %v1089 = vsub.f32 %v869, %v1088
        %1090 = vmatpush.msra.mxu0 %v1089
        %v1091 = vand.u32 %v475, 4294901760
        %v1092 = vsub.f32 %v475, %v1091
        %1093 = vmatmul.f32.gmra.mxu0 %v1092
        %v1094 = vpop.f32.mrf.mxu0
        %v1095 = vadd.f32 %v1037, %v1094
        %v1096 = vand.u32 %v476, 4294901760
        %v1097 = vsub.f32 %v476, %v1096
        %1098 = vmatmul.f32.gmra.mxu0 %v1097
        %v1099 = vpop.f32.mrf.mxu0
        %v1100 = vadd.f32 %v1041, %v1099
        %1101 = vdwg.mxu0
        %v1102 = vand.u32 %v884, 4294901760
        %1103 = vmatpush.msra.mxu0 %v1102
        %v1104 = vand.u32 %v883, 4294901760
        %1105 = vmatpush.msra.mxu0 %v1104
        %v1106 = vand.u32 %v882, 4294901760
        %1107 = vmatpush.msra.mxu0 %v1106
        %v1108 = vand.u32 %v881, 4294901760
        %1109 = vmatpush.msra.mxu0 %v1108
        %v1110 = vand.u32 %v880, 4294901760
        %1111 = vmatpush.msra.mxu0 %v1110
        %v1112 = vand.u32 %v879, 4294901760
        %1113 = vmatpush.msra.mxu0 %v1112
        %v1114 = vand.u32 %v878, 4294901760
        %1115 = vmatpush.msra.mxu0 %v1114
        %v1116 = vand.u32 %v877, 4294901760
        %1117 = vmatpush.msra.mxu0 %v1116
        %v1118 = vand.u32 %v876, 4294901760
        %1119 = vmatpush.msra.mxu0 %v1118
        %v1120 = vand.u32 %v875, 4294901760
        %1121 = vmatpush.msra.mxu0 %v1120
        %v1122 = vand.u32 %v874, 4294901760
        %1123 = vmatpush.msra.mxu0 %v1122
        %v1124 = vand.u32 %v873, 4294901760
        %1125 = vmatpush.msra.mxu0 %v1124
        %v1126 = vand.u32 %v872, 4294901760
        %1127 = vmatpush.msra.mxu0 %v1126
        %v1128 = vand.u32 %v871, 4294901760
        %1129 = vmatpush.msra.mxu0 %v1128
        %v1130 = vand.u32 %v870, 4294901760
        %1131 = vmatpush.msra.mxu0 %v1130
        %v1132 = vand.u32 %v869, 4294901760
        %1133 = vmatpush.msra.mxu0 %v1132
        %v1134 = vand.u32 %v475, 4294901760
        %v1135 = vsub.f32 %v475, %v1134
        %v1136 = vand.u32 %v1135, 4294901760
        %1137 = vmatmul.f32.gmra.mxu0 %v1136
        %v1138 = vpop.f32.mrf.mxu0
        %v1139 = vadd.f32 %v1095, %v1138
        %v1140 = vand.u32 %v476, 4294901760
        %v1141 = vsub.f32 %v476, %v1140
        %v1142 = vand.u32 %v1141, 4294901760
        %1143 = vmatmul.f32.gmra.mxu0 %v1142
        %v1144 = vpop.f32.mrf.mxu0
        %v1145 = vadd.f32 %v1100, %v1144
        %1146 = vdwg.mxu0
        %v1147 = vand.u32 %v884, 4294901760
        %v1148 = vsub.f32 %v884, %v1147
        %v1149 = vand.u32 %v1148, 4294901760
        %1150 = vmatpush.msra.mxu0 %v1149
        %v1151 = vand.u32 %v883, 4294901760
        %v1152 = vsub.f32 %v883, %v1151
        %v1153 = vand.u32 %v1152, 4294901760
        %1154 = vmatpush.msra.mxu0 %v1153
        %v1155 = vand.u32 %v882, 4294901760
        %v1156 = vsub.f32 %v882, %v1155
        %v1157 = vand.u32 %v1156, 4294901760
        %1158 = vmatpush.msra.mxu0 %v1157
        %v1159 = vand.u32 %v881, 4294901760
        %v1160 = vsub.f32 %v881, %v1159
        %v1161 = vand.u32 %v1160, 4294901760
        %1162 = vmatpush.msra.mxu0 %v1161
        %v1163 = vand.u32 %v880, 4294901760
        %v1164 = vsub.f32 %v880, %v1163
        %v1165 = vand.u32 %v1164, 4294901760
        %1166 = vmatpush.msra.mxu0 %v1165
        %v1167 = vand.u32 %v879, 4294901760
        %v1168 = vsub.f32 %v879, %v1167
        %v1169 = vand.u32 %v1168, 4294901760
        %1170 = vmatpush.msra.mxu0 %v1169
        %v1171 = vand.u32 %v878, 4294901760
        %v1172 = vsub.f32 %v878, %v1171
        %v1173 = vand.u32 %v1172, 4294901760
        %1174 = vmatpush.msra.mxu0 %v1173
        %v1175 = vand.u32 %v877, 4294901760
        %v1176 = vsub.f32 %v877, %v1175
        %v1177 = vand.u32 %v1176, 4294901760
        %1178 = vmatpush.msra.mxu0 %v1177
        %v1179 = vand.u32 %v876, 4294901760
        %v1180 = vsub.f32 %v876, %v1179
        %v1181 = vand.u32 %v1180, 4294901760
        %1182 = vmatpush.msra.mxu0 %v1181
        %v1183 = vand.u32 %v875, 4294901760
        %v1184 = vsub.f32 %v875, %v1183
        %v1185 = vand.u32 %v1184, 4294901760
        %1186 = vmatpush.msra.mxu0 %v1185
        %v1187 = vand.u32 %v874, 4294901760
        %v1188 = vsub.f32 %v874, %v1187
        %v1189 = vand.u32 %v1188, 4294901760
        %1190 = vmatpush.msra.mxu0 %v1189
        %v1191 = vand.u32 %v873, 4294901760
        %v1192 = vsub.f32 %v873, %v1191
        %v1193 = vand.u32 %v1192, 4294901760
        %1194 = vmatpush.msra.mxu0 %v1193
        %v1195 = vand.u32 %v872, 4294901760
        %v1196 = vsub.f32 %v872, %v1195
        %v1197 = vand.u32 %v1196, 4294901760
        %1198 = vmatpush.msra.mxu0 %v1197
        %v1199 = vand.u32 %v871, 4294901760
        %v1200 = vsub.f32 %v871, %v1199
        %v1201 = vand.u32 %v1200, 4294901760
        %1202 = vmatpush.msra.mxu0 %v1201
        %v1203 = vand.u32 %v870, 4294901760
        %v1204 = vsub.f32 %v870, %v1203
        %v1205 = vand.u32 %v1204, 4294901760
        %1206 = vmatpush.msra.mxu0 %v1205
        %v1207 = vand.u32 %v869, 4294901760
        %v1208 = vsub.f32 %v869, %v1207
        %v1209 = vand.u32 %v1208, 4294901760
        %1210 = vmatpush.msra.mxu0 %v1209
        %v1211 = vand.u32 %v475, 4294901760
        %1212 = vmatmul.f32.gmra.mxu0 %v1211
        %v1213 = vpop.f32.mrf.mxu0
        %v1214 = vadd.f32 %v1139, %v1213
        %v1215 = vand.u32 %v476, 4294901760
        %1216 = vmatmul.f32.gmra.mxu0 %v1215
        %v1217 = vpop.f32.mrf.mxu0
        %v1218 = vadd.f32 %v1145, %v1217
        %1219 = vdwg.mxu0
        %v1220 = vand.u32 %v884, 4294901760
        %1221 = vmatpush.msra.mxu0 %v1220
        %v1222 = vand.u32 %v883, 4294901760
        %1223 = vmatpush.msra.mxu0 %v1222
        %v1224 = vand.u32 %v882, 4294901760
        %1225 = vmatpush.msra.mxu0 %v1224
        %v1226 = vand.u32 %v881, 4294901760
        %1227 = vmatpush.msra.mxu0 %v1226
        %v1228 = vand.u32 %v880, 4294901760
        %1229 = vmatpush.msra.mxu0 %v1228
        %v1230 = vand.u32 %v879, 4294901760
        %1231 = vmatpush.msra.mxu0 %v1230
        %v1232 = vand.u32 %v878, 4294901760
        %1233 = vmatpush.msra.mxu0 %v1232
        %v1234 = vand.u32 %v877, 4294901760
        %1235 = vmatpush.msra.mxu0 %v1234
        %v1236 = vand.u32 %v876, 4294901760
        %1237 = vmatpush.msra.mxu0 %v1236
        %v1238 = vand.u32 %v875, 4294901760
        %1239 = vmatpush.msra.mxu0 %v1238
        %v1240 = vand.u32 %v874, 4294901760
        %1241 = vmatpush.msra.mxu0 %v1240
        %v1242 = vand.u32 %v873, 4294901760
        %1243 = vmatpush.msra.mxu0 %v1242
        %v1244 = vand.u32 %v872, 4294901760
        %1245 = vmatpush.msra.mxu0 %v1244
        %v1246 = vand.u32 %v871, 4294901760
        %1247 = vmatpush.msra.mxu0 %v1246
        %v1248 = vand.u32 %v870, 4294901760
        %1249 = vmatpush.msra.mxu0 %v1248
        %v1250 = vand.u32 %v869, 4294901760
        %1251 = vmatpush.msra.mxu0 %v1250
        %v1252 = vand.u32 %v475, 4294901760
        %1253 = vmatmul.f32.gmra.mxu0 %v1252
        %v1254 = vpop.f32.mrf.mxu0
        %v1255 = vadd.f32 %v1214, %v1254
        %v1256 = vand.u32 %v476, 4294901760
        %1257 = vmatmul.f32.gmra.mxu0 %v1256
        %v1258 = vpop.f32.mrf.mxu0
        %v1259 = vadd.f32 %v1218, %v1258
        %1260 = vdwg.mxu0
        %v1261 = vld [vmem:[%s450] sm:$0xff]
        %v1262 = vld [vmem:[%s450 + $0x8] sm:$0xff]
        %v1263 = vld [vmem:[%s450 + $0x10] sm:$0xff]
        %v1264 = vld [vmem:[%s450 + $0x18] sm:$0xff]
        %v1265 = vld [vmem:[%s450 + $0x20] sm:$0xff]
        %v1266 = vld [vmem:[%s450 + $0x28] sm:$0xff]
        %v1267 = vld [vmem:[%s450 + $0x30] sm:$0xff]
        %v1268 = vld [vmem:[%s450 + $0x38] sm:$0xff]
        %v1269 = vld [vmem:[%s450 + $0x40] sm:$0xff]
        %v1270 = vld [vmem:[%s450 + $0x48] sm:$0xff]
        %v1271 = vld [vmem:[%s450 + $0x50] sm:$0xff]
        %v1272 = vld [vmem:[%s450 + $0x58] sm:$0xff]
        %v1273 = vld [vmem:[%s450 + $0x60] sm:$0xff]
        %v1274 = vld [vmem:[%s450 + $0x68] sm:$0xff]
        %v1275 = vld [vmem:[%s450 + $0x70] sm:$0xff]
        %v1276 = vld [vmem:[%s450 + $0x78] sm:$0xff]
        %v1277 = vld [vmem:[%s459] sm:$0x1]
        %v1279 = vperm.slane %v1277, 0
        %v1281 = vand.u32 %v1276, 4294901760
        %1282 = vmatpush.msra.mxu0 %v1281
        %v1283 = vand.u32 %v1275, 4294901760
        %1284 = vmatpush.msra.mxu0 %v1283
        %v1285 = vand.u32 %v1274, 4294901760
        %1286 = vmatpush.msra.mxu0 %v1285
        %v1287 = vand.u32 %v1273, 4294901760
        %1288 = vmatpush.msra.mxu0 %v1287
        %v1289 = vand.u32 %v1272, 4294901760
        %1290 = vmatpush.msra.mxu0 %v1289
        %v1291 = vand.u32 %v1271, 4294901760
        %1292 = vmatpush.msra.mxu0 %v1291
        %v1293 = vand.u32 %v1270, 4294901760
        %1294 = vmatpush.msra.mxu0 %v1293
        %v1295 = vand.u32 %v1269, 4294901760
        %1296 = vmatpush.msra.mxu0 %v1295
        %v1297 = vand.u32 %v1268, 4294901760
        %1298 = vmatpush.msra.mxu0 %v1297
        %v1299 = vand.u32 %v1267, 4294901760
        %1300 = vmatpush.msra.mxu0 %v1299
        %v1301 = vand.u32 %v1266, 4294901760
        %1302 = vmatpush.msra.mxu0 %v1301
        %v1303 = vand.u32 %v1265, 4294901760
        %1304 = vmatpush.msra.mxu0 %v1303
        %v1305 = vand.u32 %v1264, 4294901760
        %1306 = vmatpush.msra.mxu0 %v1305
        %v1307 = vand.u32 %v1263, 4294901760
        %1308 = vmatpush.msra.mxu0 %v1307
        %v1309 = vand.u32 %v1262, 4294901760
        %1310 = vmatpush.msra.mxu0 %v1309
        %v1311 = vand.u32 %v1261, 4294901760
        %1312 = vmatpush.msra.mxu0 %v1311
        %v1313 = vand.u32 %v475, 4294901760
        %v1314 = vsub.f32 %v475, %v1313
        %v1315 = vand.u32 %v1314, 4294901760
        %v1316 = vsub.f32 %v1314, %v1315
        %v1317 = vand.u32 %v1316, 4294901760
        %1318 = vmatmul.f32.gmra.mxu0 %v1317
        %v1319 = vpop.f32.mrf.mxu0
        %v1320 = vadd.f32 %v1279, %v1319
        %v1321 = vand.u32 %v476, 4294901760
        %v1322 = vsub.f32 %v476, %v1321
        %v1323 = vand.u32 %v1322, 4294901760
        %v1324 = vsub.f32 %v1322, %v1323
        %v1325 = vand.u32 %v1324, 4294901760
        %1326 = vmatmul.f32.gmra.mxu0 %v1325
        %v1327 = vpop.f32.mrf.mxu0
        %v1328 = vadd.f32 %v1279, %v1327
        %1329 = vdwg.mxu0
        %v1330 = vand.u32 %v1276, 4294901760
        %v1331 = vsub.f32 %v1276, %v1330
        %v1332 = vand.u32 %v1331, 4294901760
        %v1333 = vsub.f32 %v1331, %v1332
        %v1334 = vand.u32 %v1333, 4294901760
        %1335 = vmatpush.msra.mxu0 %v1334
        %v1336 = vand.u32 %v1275, 4294901760
        %v1337 = vsub.f32 %v1275, %v1336
        %v1338 = vand.u32 %v1337, 4294901760
        %v1339 = vsub.f32 %v1337, %v1338
        %v1340 = vand.u32 %v1339, 4294901760
        %1341 = vmatpush.msra.mxu0 %v1340
        %v1342 = vand.u32 %v1274, 4294901760
        %v1343 = vsub.f32 %v1274, %v1342
        %v1344 = vand.u32 %v1343, 4294901760
        %v1345 = vsub.f32 %v1343, %v1344
        %v1346 = vand.u32 %v1345, 4294901760
        %1347 = vmatpush.msra.mxu0 %v1346
        %v1348 = vand.u32 %v1273, 4294901760
        %v1349 = vsub.f32 %v1273, %v1348
        %v1350 = vand.u32 %v1349, 4294901760
        %v1351 = vsub.f32 %v1349, %v1350
        %v1352 = vand.u32 %v1351, 4294901760
        %1353 = vmatpush.msra.mxu0 %v1352
        %v1354 = vand.u32 %v1272, 4294901760
        %v1355 = vsub.f32 %v1272, %v1354
        %v1356 = vand.u32 %v1355, 4294901760
        %v1357 = vsub.f32 %v1355, %v1356
        %v1358 = vand.u32 %v1357, 4294901760
        %1359 = vmatpush.msra.mxu0 %v1358
        %v1360 = vand.u32 %v1271, 4294901760
        %v1361 = vsub.f32 %v1271, %v1360
        %v1362 = vand.u32 %v1361, 4294901760
        %v1363 = vsub.f32 %v1361, %v1362
        %v1364 = vand.u32 %v1363, 4294901760
        %1365 = vmatpush.msra.mxu0 %v1364
        %v1366 = vand.u32 %v1270, 4294901760
        %v1367 = vsub.f32 %v1270, %v1366
        %v1368 = vand.u32 %v1367, 4294901760
        %v1369 = vsub.f32 %v1367, %v1368
        %v1370 = vand.u32 %v1369, 4294901760
        %1371 = vmatpush.msra.mxu0 %v1370
        %v1372 = vand.u32 %v1269, 4294901760
        %v1373 = vsub.f32 %v1269, %v1372
        %v1374 = vand.u32 %v1373, 4294901760
        %v1375 = vsub.f32 %v1373, %v1374
        %v1376 = vand.u32 %v1375, 4294901760
        %1377 = vmatpush.msra.mxu0 %v1376
        %v1378 = vand.u32 %v1268, 4294901760
        %v1379 = vsub.f32 %v1268, %v1378
        %v1380 = vand.u32 %v1379, 4294901760
        %v1381 = vsub.f32 %v1379, %v1380
        %v1382 = vand.u32 %v1381, 4294901760
        %1383 = vmatpush.msra.mxu0 %v1382
        %v1384 = vand.u32 %v1267, 4294901760
        %v1385 = vsub.f32 %v1267, %v1384
        %v1386 = vand.u32 %v1385, 4294901760
        %v1387 = vsub.f32 %v1385, %v1386
        %v1388 = vand.u32 %v1387, 4294901760
        %1389 = vmatpush.msra.mxu0 %v1388
        %v1390 = vand.u32 %v1266, 4294901760
        %v1391 = vsub.f32 %v1266, %v1390
        %v1392 = vand.u32 %v1391, 4294901760
        %v1393 = vsub.f32 %v1391, %v1392
        %v1394 = vand.u32 %v1393, 4294901760
        %1395 = vmatpush.msra.mxu0 %v1394
        %v1396 = vand.u32 %v1265, 4294901760
        %v1397 = vsub.f32 %v1265, %v1396
        %v1398 = vand.u32 %v1397, 4294901760
        %v1399 = vsub.f32 %v1397, %v1398
        %v1400 = vand.u32 %v1399, 4294901760
        %1401 = vmatpush.msra.mxu0 %v1400
        %v1402 = vand.u32 %v1264, 4294901760
        %v1403 = vsub.f32 %v1264, %v1402
        %v1404 = vand.u32 %v1403, 4294901760
        %v1405 = vsub.f32 %v1403, %v1404
        %v1406 = vand.u32 %v1405, 4294901760
        %1407 = vmatpush.msra.mxu0 %v1406
        %v1408 = vand.u32 %v1263, 4294901760
        %v1409 = vsub.f32 %v1263, %v1408
        %v1410 = vand.u32 %v1409, 4294901760
        %v1411 = vsub.f32 %v1409, %v1410
        %v1412 = vand.u32 %v1411, 4294901760
        %1413 = vmatpush.msra.mxu0 %v1412
        %v1414 = vand.u32 %v1262, 4294901760
        %v1415 = vsub.f32 %v1262, %v1414
        %v1416 = vand.u32 %v1415, 4294901760
        %v1417 = vsub.f32 %v1415, %v1416
        %v1418 = vand.u32 %v1417, 4294901760
        %1419 = vmatpush.msra.mxu0 %v1418
        %v1420 = vand.u32 %v1261, 4294901760
        %v1421 = vsub.f32 %v1261, %v1420
        %v1422 = vand.u32 %v1421, 4294901760
        %v1423 = vsub.f32 %v1421, %v1422
        %v1424 = vand.u32 %v1423, 4294901760
        %1425 = vmatpush.msra.mxu0 %v1424
        %v1426 = vand.u32 %v475, 4294901760
        %1427 = vmatmul.f32.gmra.mxu0 %v1426
        %v1428 = vpop.f32.mrf.mxu0
        %v1429 = vadd.f32 %v1320, %v1428
        %v1430 = vand.u32 %v476, 4294901760
        %1431 = vmatmul.f32.gmra.mxu0 %v1430
        %v1432 = vpop.f32.mrf.mxu0
        %v1433 = vadd.f32 %v1328, %v1432
        %1434 = vdwg.mxu0
        %v1435 = vand.u32 %v1276, 4294901760
        %v1436 = vsub.f32 %v1276, %v1435
        %1437 = vmatpush.msra.mxu0 %v1436
        %v1438 = vand.u32 %v1275, 4294901760
        %v1439 = vsub.f32 %v1275, %v1438
        %1440 = vmatpush.msra.mxu0 %v1439
        %v1441 = vand.u32 %v1274, 4294901760
        %v1442 = vsub.f32 %v1274, %v1441
        %1443 = vmatpush.msra.mxu0 %v1442
        %v1444 = vand.u32 %v1273, 4294901760
        %v1445 = vsub.f32 %v1273, %v1444
        %1446 = vmatpush.msra.mxu0 %v1445
        %v1447 = vand.u32 %v1272, 4294901760
        %v1448 = vsub.f32 %v1272, %v1447
        %1449 = vmatpush.msra.mxu0 %v1448
        %v1450 = vand.u32 %v1271, 4294901760
        %v1451 = vsub.f32 %v1271, %v1450
        %1452 = vmatpush.msra.mxu0 %v1451
        %v1453 = vand.u32 %v1270, 4294901760
        %v1454 = vsub.f32 %v1270, %v1453
        %1455 = vmatpush.msra.mxu0 %v1454
        %v1456 = vand.u32 %v1269, 4294901760
        %v1457 = vsub.f32 %v1269, %v1456
        %1458 = vmatpush.msra.mxu0 %v1457
        %v1459 = vand.u32 %v1268, 4294901760
        %v1460 = vsub.f32 %v1268, %v1459
        %1461 = vmatpush.msra.mxu0 %v1460
        %v1462 = vand.u32 %v1267, 4294901760
        %v1463 = vsub.f32 %v1267, %v1462
        %1464 = vmatpush.msra.mxu0 %v1463
        %v1465 = vand.u32 %v1266, 4294901760
        %v1466 = vsub.f32 %v1266, %v1465
        %1467 = vmatpush.msra.mxu0 %v1466
        %v1468 = vand.u32 %v1265, 4294901760
        %v1469 = vsub.f32 %v1265, %v1468
        %1470 = vmatpush.msra.mxu0 %v1469
        %v1471 = vand.u32 %v1264, 4294901760
        %v1472 = vsub.f32 %v1264, %v1471
        %1473 = vmatpush.msra.mxu0 %v1472
        %v1474 = vand.u32 %v1263, 4294901760
        %v1475 = vsub.f32 %v1263, %v1474
        %1476 = vmatpush.msra.mxu0 %v1475
        %v1477 = vand.u32 %v1262, 4294901760
        %v1478 = vsub.f32 %v1262, %v1477
        %1479 = vmatpush.msra.mxu0 %v1478
        %v1480 = vand.u32 %v1261, 4294901760
        %v1481 = vsub.f32 %v1261, %v1480
        %1482 = vmatpush.msra.mxu0 %v1481
        %v1483 = vand.u32 %v475, 4294901760
        %v1484 = vsub.f32 %v475, %v1483
        %1485 = vmatmul.f32.gmra.mxu0 %v1484
        %v1486 = vpop.f32.mrf.mxu0
        %v1487 = vadd.f32 %v1429, %v1486
        %v1488 = vand.u32 %v476, 4294901760
        %v1489 = vsub.f32 %v476, %v1488
        %1490 = vmatmul.f32.gmra.mxu0 %v1489
        %v1491 = vpop.f32.mrf.mxu0
        %v1492 = vadd.f32 %v1433, %v1491
        %1493 = vdwg.mxu0
        %v1494 = vand.u32 %v1276, 4294901760
        %1495 = vmatpush.msra.mxu0 %v1494
        %v1496 = vand.u32 %v1275, 4294901760
        %1497 = vmatpush.msra.mxu0 %v1496
        %v1498 = vand.u32 %v1274, 4294901760
        %1499 = vmatpush.msra.mxu0 %v1498
        %v1500 = vand.u32 %v1273, 4294901760
        %1501 = vmatpush.msra.mxu0 %v1500
        %v1502 = vand.u32 %v1272, 4294901760
        %1503 = vmatpush.msra.mxu0 %v1502
        %v1504 = vand.u32 %v1271, 4294901760
        %1505 = vmatpush.msra.mxu0 %v1504
        %v1506 = vand.u32 %v1270, 4294901760
        %1507 = vmatpush.msra.mxu0 %v1506
        %v1508 = vand.u32 %v1269, 4294901760
        %1509 = vmatpush.msra.mxu0 %v1508
        %v1510 = vand.u32 %v1268, 4294901760
        %1511 = vmatpush.msra.mxu0 %v1510
        %v1512 = vand.u32 %v1267, 4294901760
        %1513 = vmatpush.msra.mxu0 %v1512
        %v1514 = vand.u32 %v1266, 4294901760
        %1515 = vmatpush.msra.mxu0 %v1514
        %v1516 = vand.u32 %v1265, 4294901760
        %1517 = vmatpush.msra.mxu0 %v1516
        %v1518 = vand.u32 %v1264, 4294901760
        %1519 = vmatpush.msra.mxu0 %v1518
        %v1520 = vand.u32 %v1263, 4294901760
        %1521 = vmatpush.msra.mxu0 %v1520
        %v1522 = vand.u32 %v1262, 4294901760
        %1523 = vmatpush.msra.mxu0 %v1522
        %v1524 = vand.u32 %v1261, 4294901760
        %1525 = vmatpush.msra.mxu0 %v1524
        %v1526 = vand.u32 %v475, 4294901760
        %v1527 = vsub.f32 %v475, %v1526
        %v1528 = vand.u32 %v1527, 4294901760
        %1529 = vmatmul.f32.gmra.mxu0 %v1528
        %v1530 = vpop.f32.mrf.mxu0
        %v1531 = vadd.f32 %v1487, %v1530
        %v1532 = vand.u32 %v476, 4294901760
        %v1533 = vsub.f32 %v476, %v1532
        %v1534 = vand.u32 %v1533, 4294901760
        %1535 = vmatmul.f32.gmra.mxu0 %v1534
        %v1536 = vpop.f32.mrf.mxu0
        %v1537 = vadd.f32 %v1492, %v1536
        %1538 = vdwg.mxu0
        %v1539 = vand.u32 %v1276, 4294901760
        %v1540 = vsub.f32 %v1276, %v1539
        %v1541 = vand.u32 %v1540, 4294901760
        %1542 = vmatpush.msra.mxu0 %v1541
        %v1543 = vand.u32 %v1275, 4294901760
        %v1544 = vsub.f32 %v1275, %v1543
        %v1545 = vand.u32 %v1544, 4294901760
        %1546 = vmatpush.msra.mxu0 %v1545
        %v1547 = vand.u32 %v1274, 4294901760
        %v1548 = vsub.f32 %v1274, %v1547
        %v1549 = vand.u32 %v1548, 4294901760
        %1550 = vmatpush.msra.mxu0 %v1549
        %v1551 = vand.u32 %v1273, 4294901760
        %v1552 = vsub.f32 %v1273, %v1551
        %v1553 = vand.u32 %v1552, 4294901760
        %1554 = vmatpush.msra.mxu0 %v1553
        %v1555 = vand.u32 %v1272, 4294901760
        %v1556 = vsub.f32 %v1272, %v1555
        %v1557 = vand.u32 %v1556, 4294901760
        %1558 = vmatpush.msra.mxu0 %v1557
        %v1559 = vand.u32 %v1271, 4294901760
        %v1560 = vsub.f32 %v1271, %v1559
        %v1561 = vand.u32 %v1560, 4294901760
        %1562 = vmatpush.msra.mxu0 %v1561
        %v1563 = vand.u32 %v1270, 4294901760
        %v1564 = vsub.f32 %v1270, %v1563
        %v1565 = vand.u32 %v1564, 4294901760
        %1566 = vmatpush.msra.mxu0 %v1565
        %v1567 = vand.u32 %v1269, 4294901760
        %v1568 = vsub.f32 %v1269, %v1567
        %v1569 = vand.u32 %v1568, 4294901760
        %1570 = vmatpush.msra.mxu0 %v1569
        %v1571 = vand.u32 %v1268, 4294901760
        %v1572 = vsub.f32 %v1268, %v1571
        %v1573 = vand.u32 %v1572, 4294901760
        %1574 = vmatpush.msra.mxu0 %v1573
        %v1575 = vand.u32 %v1267, 4294901760
        %v1576 = vsub.f32 %v1267, %v1575
        %v1577 = vand.u32 %v1576, 4294901760
        %1578 = vmatpush.msra.mxu0 %v1577
        %v1579 = vand.u32 %v1266, 4294901760
        %v1580 = vsub.f32 %v1266, %v1579
        %v1581 = vand.u32 %v1580, 4294901760
        %1582 = vmatpush.msra.mxu0 %v1581
        %v1583 = vand.u32 %v1265, 4294901760
        %v1584 = vsub.f32 %v1265, %v1583
        %v1585 = vand.u32 %v1584, 4294901760
        %1586 = vmatpush.msra.mxu0 %v1585
        %v1587 = vand.u32 %v1264, 4294901760
        %v1588 = vsub.f32 %v1264, %v1587
        %v1589 = vand.u32 %v1588, 4294901760
        %1590 = vmatpush.msra.mxu0 %v1589
        %v1591 = vand.u32 %v1263, 4294901760
        %v1592 = vsub.f32 %v1263, %v1591
        %v1593 = vand.u32 %v1592, 4294901760
        %1594 = vmatpush.msra.mxu0 %v1593
        %v1595 = vand.u32 %v1262, 4294901760
        %v1596 = vsub.f32 %v1262, %v1595
        %v1597 = vand.u32 %v1596, 4294901760
        %1598 = vmatpush.msra.mxu0 %v1597
        %v1599 = vand.u32 %v1261, 4294901760
        %v1600 = vsub.f32 %v1261, %v1599
        %v1601 = vand.u32 %v1600, 4294901760
        %1602 = vmatpush.msra.mxu0 %v1601
        %v1603 = vand.u32 %v475, 4294901760
        %1604 = vmatmul.f32.gmra.mxu0 %v1603
        %v1605 = vpop.f32.mrf.mxu0
        %v1606 = vadd.f32 %v1531, %v1605
        %v1607 = vand.u32 %v476, 4294901760
        %1608 = vmatmul.f32.gmra.mxu0 %v1607
        %v1609 = vpop.f32.mrf.mxu0
        %v1610 = vadd.f32 %v1537, %v1609
        %1611 = vdwg.mxu0
        %v1612 = vand.u32 %v1276, 4294901760
        %1613 = vmatpush.msra.mxu0 %v1612
        %v1614 = vand.u32 %v1275, 4294901760
        %1615 = vmatpush.msra.mxu0 %v1614
        %v1616 = vand.u32 %v1274, 4294901760
        %1617 = vmatpush.msra.mxu0 %v1616
        %v1618 = vand.u32 %v1273, 4294901760
        %1619 = vmatpush.msra.mxu0 %v1618
        %v1620 = vand.u32 %v1272, 4294901760
        %1621 = vmatpush.msra.mxu0 %v1620
        %v1622 = vand.u32 %v1271, 4294901760
        %1623 = vmatpush.msra.mxu0 %v1622
        %v1624 = vand.u32 %v1270, 4294901760
        %1625 = vmatpush.msra.mxu0 %v1624
        %v1626 = vand.u32 %v1269, 4294901760
        %1627 = vmatpush.msra.mxu0 %v1626
        %v1628 = vand.u32 %v1268, 4294901760
        %1629 = vmatpush.msra.mxu0 %v1628
        %v1630 = vand.u32 %v1267, 4294901760
        %1631 = vmatpush.msra.mxu0 %v1630
        %v1632 = vand.u32 %v1266, 4294901760
        %1633 = vmatpush.msra.mxu0 %v1632
        %v1634 = vand.u32 %v1265, 4294901760
        %1635 = vmatpush.msra.mxu0 %v1634
        %v1636 = vand.u32 %v1264, 4294901760
        %1637 = vmatpush.msra.mxu0 %v1636
        %v1638 = vand.u32 %v1263, 4294901760
        %1639 = vmatpush.msra.mxu0 %v1638
        %v1640 = vand.u32 %v1262, 4294901760
        %1641 = vmatpush.msra.mxu0 %v1640
        %v1642 = vand.u32 %v1261, 4294901760
        %1643 = vmatpush.msra.mxu0 %v1642
        %v1644 = vand.u32 %v475, 4294901760
        %1645 = vmatmul.f32.gmra.mxu0 %v1644
        %v1646 = vpop.f32.mrf.mxu0
        %v1647 = vadd.f32 %v1606, %v1646
        %v1648 = vand.u32 %v476, 4294901760
        %1649 = vmatmul.f32.gmra.mxu0 %v1648
        %v1650 = vpop.f32.mrf.mxu0
        %v1651 = vadd.f32 %v1610, %v1650
        %1652 = vdwg.mxu0
        %vm1653 = vcmask 261120
        %v1655 = vsel %vm1653, %v863, 0
        %v1658 = vsel %vm1653, %v867, 0
        %v1661 = vsel %vm1653, %v1255, 0
        %v1664 = vsel %vm1653, %v1259, 0
        %1666 = vmatpush.xpose.msra.mxu0 0.0
        %1667 = vmatpush.xpose.msra.mxu0 0.0
        %1668 = vmatpush.xpose.msra.mxu0 0.0
        %1669 = vmatpush.xpose.msra.mxu0 0.0
        %1670 = vmatpush.xpose.msra.mxu0 0.0
        %1671 = vmatpush.xpose.msra.mxu0 0.0
        %1672 = vmatpush.xpose.msra.mxu0 0.0
        %1673 = vmatpush.xpose.msra.mxu0 0.0
        %1674 = vmatpush.xpose.msra.mxu0 0.0
        %1675 = vmatpush.xpose.msra.mxu0 0.0
        %1676 = vmatpush.xpose.msra.mxu0 0.0
        %1677 = vmatpush.xpose.msra.mxu0 0.0
        %1678 = vmatpush.xpose.msra.mxu0 0.0
        %1679 = vmatpush.xpose.msra.mxu0 0.0
        %v1680 = vand.u32 %v1664, 4294901760
        %1681 = vmatpush.xpose.msra.mxu0 %v1680
        %v1682 = vand.u32 %v1661, 4294901760
        %1683 = vmatpush.xpose.msra.mxu0 %v1682
        %v1684 = vand.u32 %v1655, 4294901760
        %v1685 = vsub.f32 %v1655, %v1684
        %v1686 = vand.u32 %v1685, 4294901760
        %v1687 = vsub.f32 %v1685, %v1686
        %v1688 = vand.u32 %v1687, 4294901760
        %1689 = vmatmul.f32.gmra.mxu0 %v1688
        %v1690 = vpop.f32.mrf.mxu0
        %v1691 = vadd.f32 0.0, %v1690
        %v1692 = vand.u32 %v1658, 4294901760
        %v1693 = vsub.f32 %v1658, %v1692
        %v1694 = vand.u32 %v1693, 4294901760
        %v1695 = vsub.f32 %v1693, %v1694
        %v1696 = vand.u32 %v1695, 4294901760
        %1697 = vmatmul.f32.gmra.mxu0 %v1696
        %v1698 = vpop.f32.mrf.mxu0
        %v1699 = vadd.f32 0.0, %v1698
        %1700 = vdwg.mxu0
        %1701 = vmatpush.xpose.msra.mxu0 0.0
        %1702 = vmatpush.xpose.msra.mxu0 0.0
        %1703 = vmatpush.xpose.msra.mxu0 0.0
        %1704 = vmatpush.xpose.msra.mxu0 0.0
        %1705 = vmatpush.xpose.msra.mxu0 0.0
        %1706 = vmatpush.xpose.msra.mxu0 0.0
        %1707 = vmatpush.xpose.msra.mxu0 0.0
        %1708 = vmatpush.xpose.msra.mxu0 0.0
        %1709 = vmatpush.xpose.msra.mxu0 0.0
        %1710 = vmatpush.xpose.msra.mxu0 0.0
        %1711 = vmatpush.xpose.msra.mxu0 0.0
        %1712 = vmatpush.xpose.msra.mxu0 0.0
        %1713 = vmatpush.xpose.msra.mxu0 0.0
        %1714 = vmatpush.xpose.msra.mxu0 0.0
        %v1715 = vand.u32 %v1664, 4294901760
        %v1716 = vsub.f32 %v1664, %v1715
        %v1717 = vand.u32 %v1716, 4294901760
        %v1718 = vsub.f32 %v1716, %v1717
        %v1719 = vand.u32 %v1718, 4294901760
        %1720 = vmatpush.xpose.msra.mxu0 %v1719
        %v1721 = vand.u32 %v1661, 4294901760
        %v1722 = vsub.f32 %v1661, %v1721
        %v1723 = vand.u32 %v1722, 4294901760
        %v1724 = vsub.f32 %v1722, %v1723
        %v1725 = vand.u32 %v1724, 4294901760
        %1726 = vmatpush.xpose.msra.mxu0 %v1725
        %v1727 = vand.u32 %v1655, 4294901760
        %1728 = vmatmul.f32.gmra.mxu0 %v1727
        %v1729 = vpop.f32.mrf.mxu0
        %v1730 = vadd.f32 %v1691, %v1729
        %v1731 = vand.u32 %v1658, 4294901760
        %1732 = vmatmul.f32.gmra.mxu0 %v1731
        %v1733 = vpop.f32.mrf.mxu0
        %v1734 = vadd.f32 %v1699, %v1733
        %1735 = vdwg.mxu0
        %1736 = vmatpush.xpose.msra.mxu0 0.0
        %1737 = vmatpush.xpose.msra.mxu0 0.0
        %1738 = vmatpush.xpose.msra.mxu0 0.0
        %1739 = vmatpush.xpose.msra.mxu0 0.0
        %1740 = vmatpush.xpose.msra.mxu0 0.0
        %1741 = vmatpush.xpose.msra.mxu0 0.0
        %1742 = vmatpush.xpose.msra.mxu0 0.0
        %1743 = vmatpush.xpose.msra.mxu0 0.0
        %1744 = vmatpush.xpose.msra.mxu0 0.0
        %1745 = vmatpush.xpose.msra.mxu0 0.0
        %1746 = vmatpush.xpose.msra.mxu0 0.0
        %1747 = vmatpush.xpose.msra.mxu0 0.0
        %1748 = vmatpush.xpose.msra.mxu0 0.0
        %1749 = vmatpush.xpose.msra.mxu0 0.0
        %v1750 = vand.u32 %v1664, 4294901760
        %v1751 = vsub.f32 %v1664, %v1750
        %1752 = vmatpush.xpose.msra.mxu0 %v1751
        %v1753 = vand.u32 %v1661, 4294901760
        %v1754 = vsub.f32 %v1661, %v1753
        %1755 = vmatpush.xpose.msra.mxu0 %v1754
        %v1756 = vand.u32 %v1655, 4294901760
        %v1757 = vsub.f32 %v1655, %v1756
        %1758 = vmatmul.f32.gmra.mxu0 %v1757
        %v1759 = vpop.f32.mrf.mxu0
        %v1760 = vadd.f32 %v1730, %v1759
        %v1761 = vand.u32 %v1658, 4294901760
        %v1762 = vsub.f32 %v1658, %v1761
        %1763 = vmatmul.f32.gmra.mxu0 %v1762
        %v1764 = vpop.f32.mrf.mxu0
        %v1765 = vadd.f32 %v1734, %v1764
        %1766 = vdwg.mxu0
        %1767 = vmatpush.xpose.msra.mxu0 0.0
        %1768 = vmatpush.xpose.msra.mxu0 0.0
        %1769 = vmatpush.xpose.msra.mxu0 0.0
        %1770 = vmatpush.xpose.msra.mxu0 0.0
        %1771 = vmatpush.xpose.msra.mxu0 0.0
        %1772 = vmatpush.xpose.msra.mxu0 0.0
        %1773 = vmatpush.xpose.msra.mxu0 0.0
        %1774 = vmatpush.xpose.msra.mxu0 0.0
        %1775 = vmatpush.xpose.msra.mxu0 0.0
        %1776 = vmatpush.xpose.msra.mxu0 0.0
        %1777 = vmatpush.xpose.msra.mxu0 0.0
        %1778 = vmatpush.xpose.msra.mxu0 0.0
        %1779 = vmatpush.xpose.msra.mxu0 0.0
        %1780 = vmatpush.xpose.msra.mxu0 0.0
        %v1781 = vand.u32 %v1664, 4294901760
        %1782 = vmatpush.xpose.msra.mxu0 %v1781
        %v1783 = vand.u32 %v1661, 4294901760
        %1784 = vmatpush.xpose.msra.mxu0 %v1783
        %v1785 = vand.u32 %v1655, 4294901760
        %v1786 = vsub.f32 %v1655, %v1785
        %v1787 = vand.u32 %v1786, 4294901760
        %1788 = vmatmul.f32.gmra.mxu0 %v1787
        %v1789 = vpop.f32.mrf.mxu0
        %v1790 = vadd.f32 %v1760, %v1789
        %v1791 = vand.u32 %v1658, 4294901760
        %v1792 = vsub.f32 %v1658, %v1791
        %v1793 = vand.u32 %v1792, 4294901760
        %1794 = vmatmul.f32.gmra.mxu0 %v1793
        %v1795 = vpop.f32.mrf.mxu0
        %v1796 = vadd.f32 %v1765, %v1795
        %1797 = vdwg.mxu0
        %1798 = vmatpush.xpose.msra.mxu0 0.0
        %1799 = vmatpush.xpose.msra.mxu0 0.0
        %1800 = vmatpush.xpose.msra.mxu0 0.0
        %1801 = vmatpush.xpose.msra.mxu0 0.0
        %1802 = vmatpush.xpose.msra.mxu0 0.0
        %1803 = vmatpush.xpose.msra.mxu0 0.0
        %1804 = vmatpush.xpose.msra.mxu0 0.0
        %1805 = vmatpush.xpose.msra.mxu0 0.0
        %1806 = vmatpush.xpose.msra.mxu0 0.0
        %1807 = vmatpush.xpose.msra.mxu0 0.0
        %1808 = vmatpush.xpose.msra.mxu0 0.0
        %1809 = vmatpush.xpose.msra.mxu0 0.0
        %1810 = vmatpush.xpose.msra.mxu0 0.0
        %1811 = vmatpush.xpose.msra.mxu0 0.0
        %v1812 = vand.u32 %v1664, 4294901760
        %v1813 = vsub.f32 %v1664, %v1812
        %v1814 = vand.u32 %v1813, 4294901760
        %1815 = vmatpush.xpose.msra.mxu0 %v1814
        %v1816 = vand.u32 %v1661, 4294901760
        %v1817 = vsub.f32 %v1661, %v1816
        %v1818 = vand.u32 %v1817, 4294901760
        %1819 = vmatpush.xpose.msra.mxu0 %v1818
        %v1820 = vand.u32 %v1655, 4294901760
        %1821 = vmatmul.f32.gmra.mxu0 %v1820
        %v1822 = vpop.f32.mrf.mxu0
        %v1823 = vadd.f32 %v1790, %v1822
        %v1824 = vand.u32 %v1658, 4294901760
        %1825 = vmatmul.f32.gmra.mxu0 %v1824
        %v1826 = vpop.f32.mrf.mxu0
        %v1827 = vadd.f32 %v1796, %v1826
        %1828 = vdwg.mxu0
        %1829 = vmatpush.xpose.msra.mxu0 0.0
        %1830 = vmatpush.xpose.msra.mxu0 0.0
        %1831 = vmatpush.xpose.msra.mxu0 0.0
        %1832 = vmatpush.xpose.msra.mxu0 0.0
        %1833 = vmatpush.xpose.msra.mxu0 0.0
        %1834 = vmatpush.xpose.msra.mxu0 0.0
        %1835 = vmatpush.xpose.msra.mxu0 0.0
        %1836 = vmatpush.xpose.msra.mxu0 0.0
        %1837 = vmatpush.xpose.msra.mxu0 0.0
        %1838 = vmatpush.xpose.msra.mxu0 0.0
        %1839 = vmatpush.xpose.msra.mxu0 0.0
        %1840 = vmatpush.xpose.msra.mxu0 0.0
        %1841 = vmatpush.xpose.msra.mxu0 0.0
        %1842 = vmatpush.xpose.msra.mxu0 0.0
        %v1843 = vand.u32 %v1664, 4294901760
        %1844 = vmatpush.xpose.msra.mxu0 %v1843
        %v1845 = vand.u32 %v1661, 4294901760
        %1846 = vmatpush.xpose.msra.mxu0 %v1845
        %v1847 = vand.u32 %v1655, 4294901760
        %1848 = vmatmul.f32.gmra.mxu0 %v1847
        %v1849 = vpop.f32.mrf.mxu0
        %v1850 = vadd.f32 %v1823, %v1849
        %v1851 = vand.u32 %v1658, 4294901760
        %1852 = vmatmul.f32.gmra.mxu0 %v1851
        %v1853 = vpop.f32.mrf.mxu0
        %v1854 = vadd.f32 %v1827, %v1853
        %1855 = vdwg.mxu0
        %v1856 = vmul.f32 %v1850, 0.17677669
        %v1857 = vmul.f32 %v1854, 0.17677669
        %vm1858 = vcmask 130048
        %v1859 = vsel %vm1858, %v1856, -inf
        %1860 = vmax.xlane.f32.xlu0 %v1859
        %v1861 = vpop.xlane.xlu0 %1860
        %v1862 = vsel %vm1858, %v1857, -inf
        %1863 = vmax.xlane.f32.xlu0 %v1862
        %v1864 = vpop.xlane.xlu0 %1863
        %v1865 = vsub.f32 %v1856, %v1861
        %v1866 = vsub.f32 %v1857, %v1864
        %v1867 = vmul.f32 %v1865, 1.442695
        %v1868 = vpow.pop %v1867
        %v1869 = vmul.f32 %v1866, 1.442695
        %v1870 = vpow.pop %v1869
        %v1871 = vsel %vm1858, %v1868, 0.0
        %1872 = vadd.xlane.f32.xlu0 %v1871
        %v1873 = vpop.xlane.xlu0 %1872
        %v1874 = vsel %vm1858, %v1870, 0.0
        %1875 = vadd.xlane.f32.xlu0 %v1874
        %v1876 = vpop.xlane.xlu0 %1875
        %v1877 = vrcp.pop %v1873
        %v1878 = vmul.f32 %v1873, %v1877
        %v1879 = vsub.f32 1.0, %v1878
        %v1880 = vmul.f32 %v1877, %v1879
        %v1881 = vadd.f32 %v1877, %v1880
        %vm1882 = vweird.f32 %v1873
        %vm1883 = vweird.f32 %v1877
        %vm1884 = vmor %vm1882, %vm1883
        %v1885 = vsel %vm1884, %v1877, %v1881
        %v1886 = vand.u32 2147483647, %v1873
        %vm1887 = vcmp.eq.f32.partialorder %v1886, 8.507059e+37
        %v1888 = vand.u32 %v1873, 2147483648
        %v1889 = vor.u32 1.1754944e-38, %v1888
        %v1890 = vsel %vm1887, %v1889, %v1885
        %v1891 = vmul.f32 %v1868, %v1890
        %v1892 = vrcp.pop %v1876
        %v1893 = vmul.f32 %v1876, %v1892
        %v1894 = vsub.f32 1.0, %v1893
        %v1895 = vmul.f32 %v1892, %v1894
        %v1896 = vadd.f32 %v1892, %v1895
        %vm1897 = vweird.f32 %v1876
        %vm1898 = vweird.f32 %v1892
        %vm1899 = vmor %vm1897, %vm1898
        %v1900 = vsel %vm1899, %v1892, %v1896
        %v1901 = vand.u32 2147483647, %v1876
        %vm1902 = vcmp.eq.f32.partialorder %v1901, 8.507059e+37
        %v1903 = vand.u32 %v1876, 2147483648
        %v1904 = vor.u32 1.1754944e-38, %v1903
        %v1905 = vsel %vm1902, %v1904, %v1900
        %v1906 = vmul.f32 %v1870, %v1905
        %v1908 = vsel %vm1858, %v1891, 0
        %v1911 = vsel %vm1858, %v1906, 0
        %1913 = vmatpush.msra.mxu0 0.0
        %1914 = vmatpush.msra.mxu0 0.0
        %1915 = vmatpush.msra.mxu0 0.0
        %1916 = vmatpush.msra.mxu0 0.0
        %1917 = vmatpush.msra.mxu0 0.0
        %1918 = vmatpush.msra.mxu0 0.0
        %1919 = vmatpush.msra.mxu0 0.0
        %1920 = vmatpush.msra.mxu0 0.0
        %1921 = vmatpush.msra.mxu0 0.0
        %1922 = vmatpush.msra.mxu0 0.0
        %1923 = vmatpush.msra.mxu0 0.0
        %1924 = vmatpush.msra.mxu0 0.0
        %1925 = vmatpush.msra.mxu0 0.0
        %1926 = vmatpush.msra.mxu0 0.0
        %v1927 = vand.u32 %v1651, 4294901760
        %1928 = vmatpush.msra.mxu0 %v1927
        %v1929 = vand.u32 %v1647, 4294901760
        %1930 = vmatpush.msra.mxu0 %v1929
        %v1931 = vand.u32 %v1908, 4294901760
        %v1932 = vsub.f32 %v1908, %v1931
        %v1933 = vand.u32 %v1932, 4294901760
        %v1934 = vsub.f32 %v1932, %v1933
        %v1935 = vand.u32 %v1934, 4294901760
        %1936 = vmatmul.f32.gmra.mxu0 %v1935
        %v1937 = vpop.f32.mrf.mxu0
        %v1938 = vadd.f32 0.0, %v1937
        %v1939 = vand.u32 %v1911, 4294901760
        %v1940 = vsub.f32 %v1911, %v1939
        %v1941 = vand.u32 %v1940, 4294901760
        %v1942 = vsub.f32 %v1940, %v1941
        %v1943 = vand.u32 %v1942, 4294901760
        %1944 = vmatmul.f32.gmra.mxu0 %v1943
        %v1945 = vpop.f32.mrf.mxu0
        %v1946 = vadd.f32 0.0, %v1945
        %1947 = vdwg.mxu0
        %1948 = vmatpush.msra.mxu0 0.0
        %1949 = vmatpush.msra.mxu0 0.0
        %1950 = vmatpush.msra.mxu0 0.0
        %1951 = vmatpush.msra.mxu0 0.0
        %1952 = vmatpush.msra.mxu0 0.0
        %1953 = vmatpush.msra.mxu0 0.0
        %1954 = vmatpush.msra.mxu0 0.0
        %1955 = vmatpush.msra.mxu0 0.0
        %1956 = vmatpush.msra.mxu0 0.0
        %1957 = vmatpush.msra.mxu0 0.0
        %1958 = vmatpush.msra.mxu0 0.0
        %1959 = vmatpush.msra.mxu0 0.0
        %1960 = vmatpush.msra.mxu0 0.0
        %1961 = vmatpush.msra.mxu0 0.0
        %v1962 = vand.u32 %v1651, 4294901760
        %v1963 = vsub.f32 %v1651, %v1962
        %v1964 = vand.u32 %v1963, 4294901760
        %v1965 = vsub.f32 %v1963, %v1964
        %v1966 = vand.u32 %v1965, 4294901760
        %1967 = vmatpush.msra.mxu0 %v1966
        %v1968 = vand.u32 %v1647, 4294901760
        %v1969 = vsub.f32 %v1647, %v1968
        %v1970 = vand.u32 %v1969, 4294901760
        %v1971 = vsub.f32 %v1969, %v1970
        %v1972 = vand.u32 %v1971, 4294901760
        %1973 = vmatpush.msra.mxu0 %v1972
        %v1974 = vand.u32 %v1908, 4294901760
        %1975 = vmatmul.f32.gmra.mxu0 %v1974
        %v1976 = vpop.f32.mrf.mxu0
        %v1977 = vadd.f32 %v1938, %v1976
        %v1978 = vand.u32 %v1911, 4294901760
        %1979 = vmatmul.f32.gmra.mxu0 %v1978
        %v1980 = vpop.f32.mrf.mxu0
        %v1981 = vadd.f32 %v1946, %v1980
        %1982 = vdwg.mxu0
        %1983 = vmatpush.msra.mxu0 0.0
        %1984 = vmatpush.msra.mxu0 0.0
        %1985 = vmatpush.msra.mxu0 0.0
        %1986 = vmatpush.msra.mxu0 0.0
        %1987 = vmatpush.msra.mxu0 0.0
        %1988 = vmatpush.msra.mxu0 0.0
        %1989 = vmatpush.msra.mxu0 0.0
        %1990 = vmatpush.msra.mxu0 0.0
        %1991 = vmatpush.msra.mxu0 0.0
        %1992 = vmatpush.msra.mxu0 0.0
        %1993 = vmatpush.msra.mxu0 0.0
        %1994 = vmatpush.msra.mxu0 0.0
        %1995 = vmatpush.msra.mxu0 0.0
        %1996 = vmatpush.msra.mxu0 0.0
        %v1997 = vand.u32 %v1651, 4294901760
        %v1998 = vsub.f32 %v1651, %v1997
        %1999 = vmatpush.msra.mxu0 %v1998
        %v2000 = vand.u32 %v1647, 4294901760
        %v2001 = vsub.f32 %v1647, %v2000
        %2002 = vmatpush.msra.mxu0 %v2001
        %v2003 = vand.u32 %v1908, 4294901760
        %v2004 = vsub.f32 %v1908, %v2003
        %2005 = vmatmul.f32.gmra.mxu0 %v2004
        %v2006 = vpop.f32.mrf.mxu0
        %v2007 = vadd.f32 %v1977, %v2006
        %v2008 = vand.u32 %v1911, 4294901760
        %v2009 = vsub.f32 %v1911, %v2008
        %2010 = vmatmul.f32.gmra.mxu0 %v2009
        %v2011 = vpop.f32.mrf.mxu0
        %v2012 = vadd.f32 %v1981, %v2011
        %2013 = vdwg.mxu0
        %2014 = vmatpush.msra.mxu0 0.0
        %2015 = vmatpush.msra.mxu0 0.0
        %2016 = vmatpush.msra.mxu0 0.0
        %2017 = vmatpush.msra.mxu0 0.0
        %2018 = vmatpush.msra.mxu0 0.0
        %2019 = vmatpush.msra.mxu0 0.0
        %2020 = vmatpush.msra.mxu0 0.0
        %2021 = vmatpush.msra.mxu0 0.0
        %2022 = vmatpush.msra.mxu0 0.0
        %2023 = vmatpush.msra.mxu0 0.0
        %2024 = vmatpush.msra.mxu0 0.0
        %2025 = vmatpush.msra.mxu0 0.0
        %2026 = vmatpush.msra.mxu0 0.0
        %2027 = vmatpush.msra.mxu0 0.0
        %v2028 = vand.u32 %v1651, 4294901760
        %2029 = vmatpush.msra.mxu0 %v2028
        %v2030 = vand.u32 %v1647, 4294901760
        %2031 = vmatpush.msra.mxu0 %v2030
        %v2032 = vand.u32 %v1908, 4294901760
        %v2033 = vsub.f32 %v1908, %v2032
        %v2034 = vand.u32 %v2033, 4294901760
        %2035 = vmatmul.f32.gmra.mxu0 %v2034
        %v2036 = vpop.f32.mrf.mxu0
        %v2037 = vadd.f32 %v2007, %v2036
        %v2038 = vand.u32 %v1911, 4294901760
        %v2039 = vsub.f32 %v1911, %v2038
        %v2040 = vand.u32 %v2039, 4294901760
        %2041 = vmatmul.f32.gmra.mxu0 %v2040
        %v2042 = vpop.f32.mrf.mxu0
        %v2043 = vadd.f32 %v2012, %v2042
        %2044 = vdwg.mxu0
        %2045 = vmatpush.msra.mxu0 0.0
        %2046 = vmatpush.msra.mxu0 0.0
        %2047 = vmatpush.msra.mxu0 0.0
        %2048 = vmatpush.msra.mxu0 0.0
        %2049 = vmatpush.msra.mxu0 0.0
        %2050 = vmatpush.msra.mxu0 0.0
        %2051 = vmatpush.msra.mxu0 0.0
        %2052 = vmatpush.msra.mxu0 0.0
        %2053 = vmatpush.msra.mxu0 0.0
        %2054 = vmatpush.msra.mxu0 0.0
        %2055 = vmatpush.msra.mxu0 0.0
        %2056 = vmatpush.msra.mxu0 0.0
        %2057 = vmatpush.msra.mxu0 0.0
        %2058 = vmatpush.msra.mxu0 0.0
        %v2059 = vand.u32 %v1651, 4294901760
        %v2060 = vsub.f32 %v1651, %v2059
        %v2061 = vand.u32 %v2060, 4294901760
        %2062 = vmatpush.msra.mxu0 %v2061
        %v2063 = vand.u32 %v1647, 4294901760
        %v2064 = vsub.f32 %v1647, %v2063
        %v2065 = vand.u32 %v2064, 4294901760
        %2066 = vmatpush.msra.mxu0 %v2065
        %v2067 = vand.u32 %v1908, 4294901760
        %2068 = vmatmul.f32.gmra.mxu0 %v2067
        %v2069 = vpop.f32.mrf.mxu0
        %v2070 = vadd.f32 %v2037, %v2069
        %v2071 = vand.u32 %v1911, 4294901760
        %2072 = vmatmul.f32.gmra.mxu0 %v2071
        %v2073 = vpop.f32.mrf.mxu0
        %v2074 = vadd.f32 %v2043, %v2073
        %2075 = vdwg.mxu0
        %2076 = vmatpush.msra.mxu0 0.0
        %2077 = vmatpush.msra.mxu0 0.0
        %2078 = vmatpush.msra.mxu0 0.0
        %2079 = vmatpush.msra.mxu0 0.0
        %2080 = vmatpush.msra.mxu0 0.0
        %2081 = vmatpush.msra.mxu0 0.0
        %2082 = vmatpush.msra.mxu0 0.0
        %2083 = vmatpush.msra.mxu0 0.0
        %2084 = vmatpush.msra.mxu0 0.0
        %2085 = vmatpush.msra.mxu0 0.0
        %2086 = vmatpush.msra.mxu0 0.0
        %2087 = vmatpush.msra.mxu0 0.0
        %2088 = vmatpush.msra.mxu0 0.0
        %2089 = vmatpush.msra.mxu0 0.0
        %v2090 = vand.u32 %v1651, 4294901760
        %2091 = vmatpush.msra.mxu0 %v2090
        %v2092 = vand.u32 %v1647, 4294901760
        %2093 = vmatpush.msra.mxu0 %v2092
        %v2094 = vand.u32 %v1908, 4294901760
        %2095 = vmatmul.f32.gmra.mxu0 %v2094
        %v2096 = vpop.f32.mrf.mxu0
        %v2097 = vadd.f32 %v2070, %v2096
        %v2098 = vand.u32 %v1911, 4294901760
        %2099 = vmatmul.f32.gmra.mxu0 %v2098
        %v2100 = vpop.f32.mrf.mxu0
        %v2101 = vadd.f32 %v2074, %v2100
        %2102 = vdwg.mxu0
        %v2103 = vld [vmem:[#allocation2] sm:$0xff]
        %v2104 = vld [vmem:[#allocation2 + $0x8] sm:$0xff]
        %v2105 = vld [vmem:[%s464] sm:$0xff]
        %v2106 = vld [vmem:[%s464 + $0x8] sm:$0xff]
        %v2107 = vld [vmem:[%s464 + $0x10] sm:$0xff]
        %v2108 = vld [vmem:[%s464 + $0x18] sm:$0xff]
        %v2110 = vsel %vm1653, %v2097, 0
        %v2113 = vsel %vm1653, %v2101, 0
        %2115 = vmatpush.msra.mxu0 0.0
        %2116 = vmatpush.msra.mxu0 0.0
        %2117 = vmatpush.msra.mxu0 0.0
        %2118 = vmatpush.msra.mxu0 0.0
        %2119 = vmatpush.msra.mxu0 0.0
        %2120 = vmatpush.msra.mxu0 0.0
        %2121 = vmatpush.msra.mxu0 0.0
        %2122 = vmatpush.msra.mxu0 0.0
        %2123 = vmatpush.msra.mxu0 0.0
        %2124 = vmatpush.msra.mxu0 0.0
        %2125 = vmatpush.msra.mxu0 0.0
        %2126 = vmatpush.msra.mxu0 0.0
        %v2127 = vand.u32 %v2108, 4294901760
        %2128 = vmatpush.msra.mxu0 %v2127
        %v2129 = vand.u32 %v2107, 4294901760
        %2130 = vmatpush.msra.mxu0 %v2129
        %v2131 = vand.u32 %v2106, 4294901760
        %2132 = vmatpush.msra.mxu0 %v2131
        %v2133 = vand.u32 %v2105, 4294901760
        %2134 = vmatpush.msra.mxu0 %v2133
        %v2135 = vand.u32 %v2110, 4294901760
        %v2136 = vsub.f32 %v2110, %v2135
        %v2137 = vand.u32 %v2136, 4294901760
        %v2138 = vsub.f32 %v2136, %v2137
        %v2139 = vand.u32 %v2138, 4294901760
        %2140 = vmatmul.f32.gmra.mxu0 %v2139
        %v2141 = vpop.f32.mrf.mxu0
        %v2142 = vadd.f32 0.0, %v2141
        %v2143 = vand.u32 %v2113, 4294901760
        %v2144 = vsub.f32 %v2113, %v2143
        %v2145 = vand.u32 %v2144, 4294901760
        %v2146 = vsub.f32 %v2144, %v2145
        %v2147 = vand.u32 %v2146, 4294901760
        %2148 = vmatmul.f32.gmra.mxu0 %v2147
        %v2149 = vpop.f32.mrf.mxu0
        %v2150 = vadd.f32 0.0, %v2149
        %2151 = vdwg.mxu0
        %2152 = vmatpush.msra.mxu0 0.0
        %2153 = vmatpush.msra.mxu0 0.0
        %2154 = vmatpush.msra.mxu0 0.0
        %2155 = vmatpush.msra.mxu0 0.0
        %2156 = vmatpush.msra.mxu0 0.0
        %2157 = vmatpush.msra.mxu0 0.0
        %2158 = vmatpush.msra.mxu0 0.0
        %2159 = vmatpush.msra.mxu0 0.0
        %2160 = vmatpush.msra.mxu0 0.0
        %2161 = vmatpush.msra.mxu0 0.0
        %2162 = vmatpush.msra.mxu0 0.0
        %2163 = vmatpush.msra.mxu0 0.0
        %v2164 = vand.u32 %v2108, 4294901760
        %v2165 = vsub.f32 %v2108, %v2164
        %v2166 = vand.u32 %v2165, 4294901760
        %v2167 = vsub.f32 %v2165, %v2166
        %v2168 = vand.u32 %v2167, 4294901760
        %2169 = vmatpush.msra.mxu0 %v2168
        %v2170 = vand.u32 %v2107, 4294901760
        %v2171 = vsub.f32 %v2107, %v2170
        %v2172 = vand.u32 %v2171, 4294901760
        %v2173 = vsub.f32 %v2171, %v2172
        %v2174 = vand.u32 %v2173, 4294901760
        %2175 = vmatpush.msra.mxu0 %v2174
        %v2176 = vand.u32 %v2106, 4294901760
        %v2177 = vsub.f32 %v2106, %v2176
        %v2178 = vand.u32 %v2177, 4294901760
        %v2179 = vsub.f32 %v2177, %v2178
        %v2180 = vand.u32 %v2179, 4294901760
        %2181 = vmatpush.msra.mxu0 %v2180
        %v2182 = vand.u32 %v2105, 4294901760
        %v2183 = vsub.f32 %v2105, %v2182
        %v2184 = vand.u32 %v2183, 4294901760
        %v2185 = vsub.f32 %v2183, %v2184
        %v2186 = vand.u32 %v2185, 4294901760
        %2187 = vmatpush.msra.mxu0 %v2186
        %v2188 = vand.u32 %v2110, 4294901760
        %2189 = vmatmul.f32.gmra.mxu0 %v2188
        %v2190 = vpop.f32.mrf.mxu0
        %v2191 = vadd.f32 %v2142, %v2190
        %v2192 = vand.u32 %v2113, 4294901760
        %2193 = vmatmul.f32.gmra.mxu0 %v2192
        %v2194 = vpop.f32.mrf.mxu0
        %v2195 = vadd.f32 %v2150, %v2194
        %2196 = vdwg.mxu0
        %2197 = vmatpush.msra.mxu0 0.0
        %2198 = vmatpush.msra.mxu0 0.0
        %2199 = vmatpush.msra.mxu0 0.0
        %2200 = vmatpush.msra.mxu0 0.0
        %2201 = vmatpush.msra.mxu0 0.0
        %2202 = vmatpush.msra.mxu0 0.0
        %2203 = vmatpush.msra.mxu0 0.0
        %2204 = vmatpush.msra.mxu0 0.0
        %2205 = vmatpush.msra.mxu0 0.0
        %2206 = vmatpush.msra.mxu0 0.0
        %2207 = vmatpush.msra.mxu0 0.0
        %2208 = vmatpush.msra.mxu0 0.0
        %v2209 = vand.u32 %v2108, 4294901760
        %v2210 = vsub.f32 %v2108, %v2209
        %2211 = vmatpush.msra.mxu0 %v2210
        %v2212 = vand.u32 %v2107, 4294901760
        %v2213 = vsub.f32 %v2107, %v2212
        %2214 = vmatpush.msra.mxu0 %v2213
        %v2215 = vand.u32 %v2106, 4294901760
        %v2216 = vsub.f32 %v2106, %v2215
        %2217 = vmatpush.msra.mxu0 %v2216
        %v2218 = vand.u32 %v2105, 4294901760
        %v2219 = vsub.f32 %v2105, %v2218
        %2220 = vmatpush.msra.mxu0 %v2219
        %v2221 = vand.u32 %v2110, 4294901760
        %v2222 = vsub.f32 %v2110, %v2221
        %2223 = vmatmul.f32.gmra.mxu0 %v2222
        %v2224 = vpop.f32.mrf.mxu0
        %v2225 = vadd.f32 %v2191, %v2224
        %v2226 = vand.u32 %v2113, 4294901760
        %v2227 = vsub.f32 %v2113, %v2226
        %2228 = vmatmul.f32.gmra.mxu0 %v2227
        %v2229 = vpop.f32.mrf.mxu0
        %v2230 = vadd.f32 %v2195, %v2229
        %2231 = vdwg.mxu0
        %2232 = vmatpush.msra.mxu0 0.0
        %2233 = vmatpush.msra.mxu0 0.0
        %2234 = vmatpush.msra.mxu0 0.0
        %2235 = vmatpush.msra.mxu0 0.0
        %2236 = vmatpush.msra.mxu0 0.0
        %2237 = vmatpush.msra.mxu0 0.0
        %2238 = vmatpush.msra.mxu0 0.0
        %2239 = vmatpush.msra.mxu0 0.0
        %2240 = vmatpush.msra.mxu0 0.0
        %2241 = vmatpush.msra.mxu0 0.0
        %2242 = vmatpush.msra.mxu0 0.0
        %2243 = vmatpush.msra.mxu0 0.0
        %v2244 = vand.u32 %v2108, 4294901760
        %2245 = vmatpush.msra.mxu0 %v2244
        %v2246 = vand.u32 %v2107, 4294901760
        %2247 = vmatpush.msra.mxu0 %v2246
        %v2248 = vand.u32 %v2106, 4294901760
        %2249 = vmatpush.msra.mxu0 %v2248
        %v2250 = vand.u32 %v2105, 4294901760
        %2251 = vmatpush.msra.mxu0 %v2250
        %v2252 = vand.u32 %v2110, 4294901760
        %v2253 = vsub.f32 %v2110, %v2252
        %v2254 = vand.u32 %v2253, 4294901760
        %2255 = vmatmul.f32.gmra.mxu0 %v2254
        %v2256 = vpop.f32.mrf.mxu0
        %v2257 = vadd.f32 %v2225, %v2256
        %v2258 = vand.u32 %v2113, 4294901760
        %v2259 = vsub.f32 %v2113, %v2258
        %v2260 = vand.u32 %v2259, 4294901760
        %2261 = vmatmul.f32.gmra.mxu0 %v2260
        %v2262 = vpop.f32.mrf.mxu0
        %v2263 = vadd.f32 %v2230, %v2262
        %2264 = vdwg.mxu0
        %2265 = vmatpush.msra.mxu0 0.0
        %2266 = vmatpush.msra.mxu0 0.0
        %2267 = vmatpush.msra.mxu0 0.0
        %2268 = vmatpush.msra.mxu0 0.0
        %2269 = vmatpush.msra.mxu0 0.0
        %2270 = vmatpush.msra.mxu0 0.0
        %2271 = vmatpush.msra.mxu0 0.0
        %2272 = vmatpush.msra.mxu0 0.0
        %2273 = vmatpush.msra.mxu0 0.0
        %2274 = vmatpush.msra.mxu0 0.0
        %2275 = vmatpush.msra.mxu0 0.0
        %2276 = vmatpush.msra.mxu0 0.0
        %v2277 = vand.u32 %v2108, 4294901760
        %v2278 = vsub.f32 %v2108, %v2277
        %v2279 = vand.u32 %v2278, 4294901760
        %2280 = vmatpush.msra.mxu0 %v2279
        %v2281 = vand.u32 %v2107, 4294901760
        %v2282 = vsub.f32 %v2107, %v2281
        %v2283 = vand.u32 %v2282, 4294901760
        %2284 = vmatpush.msra.mxu0 %v2283
        %v2285 = vand.u32 %v2106, 4294901760
        %v2286 = vsub.f32 %v2106, %v2285
        %v2287 = vand.u32 %v2286, 4294901760
        %2288 = vmatpush.msra.mxu0 %v2287
        %v2289 = vand.u32 %v2105, 4294901760
        %v2290 = vsub.f32 %v2105, %v2289
        %v2291 = vand.u32 %v2290, 4294901760
        %2292 = vmatpush.msra.mxu0 %v2291
        %v2293 = vand.u32 %v2110, 4294901760
        %2294 = vmatmul.f32.gmra.mxu0 %v2293
        %v2295 = vpop.f32.mrf.mxu0
        %v2296 = vadd.f32 %v2257, %v2295
        %v2297 = vand.u32 %v2113, 4294901760
        %2298 = vmatmul.f32.gmra.mxu0 %v2297
        %v2299 = vpop.f32.mrf.mxu0
        %v2300 = vadd.f32 %v2263, %v2299
        %2301 = vdwg.mxu0
        %2302 = vmatpush.msra.mxu0 0.0
        %2303 = vmatpush.msra.mxu0 0.0
        %2304 = vmatpush.msra.mxu0 0.0
        %2305 = vmatpush.msra.mxu0 0.0
        %2306 = vmatpush.msra.mxu0 0.0
        %2307 = vmatpush.msra.mxu0 0.0
        %2308 = vmatpush.msra.mxu0 0.0
        %2309 = vmatpush.msra.mxu0 0.0
        %2310 = vmatpush.msra.mxu0 0.0
        %2311 = vmatpush.msra.mxu0 0.0
        %2312 = vmatpush.msra.mxu0 0.0
        %2313 = vmatpush.msra.mxu0 0.0
        %v2314 = vand.u32 %v2108, 4294901760
        %2315 = vmatpush.msra.mxu0 %v2314
        %v2316 = vand.u32 %v2107, 4294901760
        %2317 = vmatpush.msra.mxu0 %v2316
        %v2318 = vand.u32 %v2106, 4294901760
        %2319 = vmatpush.msra.mxu0 %v2318
        %v2320 = vand.u32 %v2105, 4294901760
        %2321 = vmatpush.msra.mxu0 %v2320
        %v2322 = vand.u32 %v2110, 4294901760
        %2323 = vmatmul.f32.gmra.mxu0 %v2322
        %v2324 = vpop.f32.mrf.mxu0
        %v2325 = vadd.f32 %v2296, %v2324
        %v2326 = vand.u32 %v2113, 4294901760
        %2327 = vmatmul.f32.gmra.mxu0 %v2326
        %v2328 = vpop.f32.mrf.mxu0
        %v2329 = vadd.f32 %v2300, %v2328
        %2330 = vdwg.mxu0
        %v2331 = vadd.f32 %v2103, %v2325
        %v2332 = vadd.f32 %v2104, %v2329
        %2333 = vst [vmem:[#allocation2] sm:$0xff] %v2331
        %2334 = vst [vmem:[#allocation2 + $0x8] sm:$0xff] %v2332
        %p2335 = scmp.eq.s32.totalorder %s28, 3
        // Predicated region
        $region61: #{tpu_custom_call.1} parent=55 // pred_check
          %p2336 = pneg %p2335
        $region62: #{tpu_custom_call.1} parent=55 // pred_check_branch
          %2338 = sbr.rel (%p2336) target = $region64
        $region63: #{tpu_custom_call.1} parent=55 // pred_region
          %v2339 = vld [vmem:[#allocation2] sm:$0xff]
          %v2340 = vld [vmem:[#allocation2 + $0x8] sm:$0xff]
          %2341 = vst [vmem:[%s430] sm:$0xff] %v2339
          %2342 = vst [vmem:[%s430 + $0x8] sm:$0xff] %v2340
        $region64: #{tpu_custom_call.1} parent=55 // pred_fallthru
          _
        %s2343 = sand.u32 %s272, 1
        %s2344 = scalar_lea.sflag [#allocation4], %s2343
        %s2345 = sand.u32 %s272, 1
        %s2346 = smul.addr %s2345, 16
        %s2347 = scalar_lea.vmem [#allocation3], %s2346
        // Predicated region
        $region65: #{tpu_custom_call.1} parent=55 // pred_check
          %p2348 = pneg %p282
        $region66: #{tpu_custom_call.1} parent=55 // pred_check_branch
          %2350 = sbr.rel (%p2348) target = $region68
        $region67: #{tpu_custom_call.1} parent=55 // pred_region
          %2352 = vsyncadd %s2344, 0
          %s2353 = smul.addr %s27, 2
          %s2354 = smul.addr %s2353, 8
          %s2355 = scalar_lea.hbm %s9, %s2354
          %s2356 = sshll.u32 %s2347, 4
          %s2357 = int_to_ptr.vmem [resolvable:$true] %s2356
          %s2358 = sshll.u32 %s2355, 4
          %s2359 = int_to_ptr.hbm [resolvable:$true] %s2358
          %2364 = dma.vmem_to_hbm [thread:$0]  %s2357, 256, %s2359, %s2344, 128, 128, 8
        $region68: #{tpu_custom_call.1} parent=55 // pred_fallthru
          _
      $region56: #{tpu_custom_call.1} parent=5 // pred_fallthru
        _
      %p2365 = scmp.le.s32.totalorder 2, %s18
      // Predicated region
      $region69: #{tpu_custom_call.1} parent=5 // pred_check
        %p2366 = pneg %p2365
      $region70: #{tpu_custom_call.1} parent=5 // pred_check_branch
        %2368 = sbr.rel (%p2366) target = $region72
      $region71: #{tpu_custom_call.1} parent=5 // pred_region
        %s2369 = ssub.s32 %s18, 2
        // Predicated region
        $region73: #{tpu_custom_call.1} parent=71 // pred_check
          %p2370 = pneg %p288
        $region74: #{tpu_custom_call.1} parent=71 // pred_check_branch
          %2372 = sbr.rel (%p2370) target = $region76
        $region75: #{tpu_custom_call.1} parent=71 // pred_region
          %s2373 = sand.u32 %s273, 1
          %s2374 = scalar_lea.sflag [#allocation4], %s2373
          %s2375 = sand.u32 %s273, 1
          %s2376 = smul.addr %s2375, 16
          %s2377 = scalar_lea.vmem [#allocation3], %s2376
          %2379 = dma.done %s2374, 256
        $region76: #{tpu_custom_call.1} parent=71 // pred_fallthru
          _
      $region72: #{tpu_custom_call.1} parent=5 // pred_fallthru
        _
    $region6: #{tpu_custom_call.1} parent=1 // loop_footer
      %s22 = sadd.s32 1, %s18
    $region7: #{tpu_custom_call.1} parent=1 // loop_footer_branch
      %17 = sbr.rel target = $region3
    $region8: #{tpu_custom_call.1} parent=1 // loop_exit
      _
    %2380 = vsyncpa [#allocation4], 1
    %s2381 = scalar_lea.sflag [#allocation4], 1
    %2382 = vsyncpa %s2381, 1

</llo_original>
